<compile_context>
chip_gen: v7x
topology: tpu7x:2x2x1
jax: 0.10.0
libtpu: 0.0.40
codegen_flags: <defaults>
</compile_context>

<pallas_src>
import math

import jax
import jax.numpy as jnp
from jax.experimental import pallas as pl
from jax.experimental.pallas import tpu as pltpu


def _encoder_layer_kernel(x_ref, wqkv_ref, wo_ref, out_ref):
    # One grid step == `blk` batch elements.  The feature dim `c` is a
    # multiple of 128, so the reshapes below only regroup leading dims over
    # (8, 128)-aligned trailing dims: layout-preserving, no VMEM relayout.
    blk, l, c = x_ref.shape
    rows = blk * l

    x2d = x_ref[...].astype(jnp.bfloat16).reshape(rows, c)

    # Fused QKV projection: one (rows, C) x (C, 3C) MXU pass, f32 accumulation.
    # (W_q is pre-scaled by 1/sqrt(d_model) host-side.)  Cast to bf16 once and
    # reuse for both attention matmuls.
    qkv = jnp.dot(x2d, wqkv_ref[...], preferred_element_type=jnp.float32)
    qkv = qkv.astype(jnp.bfloat16).reshape(blk, l, 3 * c)

    # Tile-aligned splits (c % 128 == 0 -> lane-aligned, no cross-lane copy).
    q = qkv[:, :, :c]
    k = qkv[:, :, c:2 * c]
    v = qkv[:, :, 2 * c:]

    # Attention scores: batched contraction over the feature dim.
    s = jnp.einsum("bqd,bkd->bqk", q, k,
                   preferred_element_type=jnp.float32)  # (blk, L, L) f32

    # Numerically-stable softmax in f32; reciprocal on the EUP.
    # TODO(synk): for long sequences, tile the key axis with an online-softmax
    # (flash-style) inner loop so the (blk, L, L) score tensor never
    # materializes in VMEM.
    m = jnp.max(s, axis=-1, keepdims=True)
    p = jnp.exp(s - m)
    denom = jnp.sum(p, axis=-1, keepdims=True)
    attn = (p * pl.reciprocal(denom, approx=True)).astype(jnp.bfloat16)

    # Attention-weighted values + output projection.
    o = jnp.einsum("bqk,bkd->bqd", attn, v,
                   preferred_element_type=jnp.float32)  # (blk, L, C)
    y = jnp.dot(o.reshape(rows, c).astype(jnp.bfloat16), wo_ref[...],
                preferred_element_type=jnp.float32)

    # complex_dropout(self.dropout, out): identity in eval / deterministic mode.
    out_ref[...] = y.reshape(blk, l, c).astype(out_ref.dtype)


def _vmem_budget_bytes():
    """~75% of per-core VMEM: ~48 MiB on v7x (64 MiB), ~96 MiB on v5e/v6e."""
    cap = None
    try:
        info = pltpu.get_tpu_info()
        cap = getattr(info, "vmem_capacity_bytes", None)
    except Exception:
        cap = None
    if not cap:
        cap = 64 * 1024 * 1024  # conservative fallback (v7x per-core VMEM)
    return max(32 << 20, min(int(cap) * 3 // 4, 96 << 20))


def _pick_batch_block(n, seq_len, c_pad, vmem_budget_bytes):
    """Largest divisor of n whose per-step working set fits the VMEM budget,
    preferring a grid of >= 2 steps so v7x megacore can shard it."""

    def block_bytes(blk):
        rows = blk * seq_len
        io = 2 * 2 * rows * c_pad * 4                      # x + out, 2x buffered, f32
        w = (c_pad * 3 * c_pad + c_pad * c_pad) * 2 * 2    # bf16 weights (worst case 2x)
        inter = rows * 3 * c_pad * (4 + 2)                 # qkv f32 + bf16
        inter += blk * seq_len * seq_len * (4 + 2)         # scores f32 + attn bf16
        inter += rows * c_pad * (4 + 2 + 4)                # o f32/bf16 + y f32
        return io + w + inter

    divisors = [d for d in range(1, n + 1) if n % d == 0]
    preferred = [d for d in divisors if n // d >= 2] or divisors
    fitting = [d for d in preferred if block_bytes(d) <= vmem_budget_bytes]
    return max(fitting) if fitting else 1


def encoder_layer_forward(x, wq, wk, wv, wo):
    """x: (N, L, C) float32 -> (N, L, C) float32."""
    n, seq_len, d_model = x.shape
    scale = 1.0 / math.sqrt(d_model)

    # --- Host-side layout plumbing (lane-dense I/O) --------------------------
    c_pad = max(128, -(-d_model // 128) * 128)
    pad = c_pad - d_model

    def pad_w(w):
        return jnp.pad(w, ((0, pad), (0, pad))) if pad else w

    # Fold 1/sqrt(d_model) into W_q, fuse Q/K/V into one (C, 3C) matrix
    # (single wide MXU pass), cast weights to bf16 (halves weight DMA).
    w_qkv = jnp.concatenate(
        [pad_w(wq * scale), pad_w(wk), pad_w(wv)], axis=1).astype(jnp.bfloat16)
    wo_b = pad_w(wo).astype(jnp.bfloat16)
    x_p = jnp.pad(x, ((0, 0), (0, 0), (0, pad))) if pad else x

    vmem_budget = _vmem_budget_bytes()
    batch_block = _pick_batch_block(n, seq_len, c_pad, vmem_budget)
    grid = (n // batch_block,)

    def run(single_buffer_weights):
        # Constant-index weights: single-buffer them when supported.
        w_kwargs = (
            dict(pipeline_mode=pl.Buffered(1)) if single_buffer_weights else {})
        grid_spec = pltpu.PrefetchScalarGridSpec(
            num_scalar_prefetch=0,
            grid=grid,
            in_specs=[
                pl.BlockSpec((batch_block, seq_len, c_pad),
                             lambda i: (i, 0, 0)),
                pl.BlockSpec((c_pad, 3 * c_pad), lambda i: (0, 0), **w_kwargs),
                pl.BlockSpec((c_pad, c_pad), lambda i: (0, 0), **w_kwargs),
            ],
            out_specs=pl.BlockSpec((batch_block, seq_len, c_pad),
                                   lambda i: (i, 0, 0)),
        )
        return pl.pallas_call(
            _encoder_layer_kernel,
            out_shape=jax.ShapeDtypeStruct((n, seq_len, c_pad), x.dtype),
            grid_spec=grid_spec,
            compiler_params=pltpu.CompilerParams(
                dimension_semantics=("parallel",),
                vmem_limit_bytes=vmem_budget),
        )(x_p, w_qkv, wo_b)

    try:
        y_p = run(True)
    except Exception:
        # pipeline_mode=pl.Buffered(1) not supported -> default double-buffering.
        y_p = run(False)

    return y_p[..., :d_model] if pad else y_p


def _reference(x, wq, wk, wv, wo):
    d_model = x.shape[-1]
    q = jnp.einsum("nlc,cd->nld", x, wq)
    k = jnp.einsum("nlc,cd->nld", x, wk)
    v = jnp.einsum("nlc,cd->nld", x, wv)
    s = jnp.einsum("nqd,nkd->nqk", q, k) / math.sqrt(d_model)
    a = jax.nn.softmax(s, axis=-1)
    o = jnp.einsum("nqk,nkd->nqd", a, v)
    return jnp.einsum("nld,dc->nlc", o, wo)


if __name__ == "__main__":
    # Small shapes consistent with the module's "N x L x C(=d_model)" layout.
    N, L, D_MODEL = 2, 8, 32

    key = jax.random.PRNGKey(0)
    kx, kq, kk, kv, ko = jax.random.split(key, 5)

    x = jax.random.normal(kx, (N, L, D_MODEL), dtype=jnp.float32)

    # Deterministic parameter init (Linear-style uniform(-1/sqrt(d), 1/sqrt(d))).
    bound = 1.0 / math.sqrt(D_MODEL)
    wq = jax.random.uniform(kq, (D_MODEL, D_MODEL), jnp.float32, -bound, bound)
    wk = jax.random.uniform(kk, (D_MODEL, D_MODEL), jnp.float32, -bound, bound)
    wv = jax.random.uniform(kv, (D_MODEL, D_MODEL), jnp.float32, -bound, bound)
    wo = jax.random.uniform(ko, (D_MODEL, D_MODEL), jnp.float32, -bound, bound)

    y = encoder_layer_forward(x, wq, wk, wv, wo)
    y = jax.block_until_ready(y)

    y_ref = _reference(x, wq, wk, wv, wo)
    assert y.shape == (N, L, D_MODEL)
    # Tolerance accounts for bf16 MXU inputs (f32 accumulation) and the
    # EUP approximate reciprocal in the softmax.
    assert jnp.allclose(y, y_ref, atol=2e-2, rtol=2e-2), "mismatch vs JAX reference"

    print("KERNEL_OK")
</pallas_src>

<mosaic_0001>
module attributes {stable_mosaic.version = 11 : i64} {
  func.func @_encoder_layer_kernel(%arg0: i32, %arg1: memref<1x8x128xf32, #tpu.memory_space<vmem>>, %arg2: memref<128x384xbf16, #tpu.memory_space<vmem>>, %arg3: memref<128x128xbf16, #tpu.memory_space<vmem>>, %arg4: memref<1x8x128xf32, #tpu.memory_space<vmem>>) attributes {dimension_semantics = [#tpu.dimension_semantics<parallel>], iteration_bounds = array<i64: 2>, scalar_prefetch = 0 : i64, scratch_operands = 0 : i64, tpu.core_type = #tpu.core_type<tc>, window_params = [{transform_indices = @transform_0, window_bounds = array<i64: 1, 8, 128>}, {pipeline_mode = #tpu.pipeline_mode<synchronous>, transform_indices = @transform_1, window_bounds = array<i64: 128, 384>}, {pipeline_mode = #tpu.pipeline_mode<synchronous>, transform_indices = @transform_2, window_bounds = array<i64: 128, 128>}, {transform_indices = @transform_3, window_bounds = array<i64: 1, 8, 128>}]} {
    %c0 = arith.constant 0 : index
    %c0_0 = arith.constant 0 : index
    %c0_1 = arith.constant 0 : index
    %0 = vector.load %arg1[%c0, %c0_0, %c0_1] : memref<1x8x128xf32, #tpu.memory_space<vmem>>, vector<1x8x128xf32>
    %1 = arith.truncf %0 : vector<1x8x128xf32> to vector<1x8x128xbf16>
    %2 = vector.shape_cast %1 : vector<1x8x128xbf16> to vector<8x128xbf16>
    %c0_2 = arith.constant 0 : index
    %c0_3 = arith.constant 0 : index
    %3 = vector.load %arg2[%c0_2, %c0_3] : memref<128x384xbf16, #tpu.memory_space<vmem>>, vector<128x384xbf16>
    %cst = arith.constant dense<0.000000e+00> : vector<8x384xf32>
    %4 = tpu.matmul %2, %3, %cst {dimension_numbers = #tpu.dot_dimension_numbers<[1], [0], [0], [1], [0, 0, 1, 1], [], []>} : vector<8x128xbf16>, vector<128x384xbf16>, vector<8x384xf32> -> vector<8x384xf32>
    %5 = arith.truncf %4 : vector<8x384xf32> to vector<8x384xbf16>
    %6 = vector.shape_cast %5 : vector<8x384xbf16> to vector<1x8x384xbf16>
    %7 = vector.extract_strided_slice %6 {offsets = [0, 0, 0], sizes = [1, 8, 128], strides = [1, 1, 1]} : vector<1x8x384xbf16> to vector<1x8x128xbf16>
    %8 = vector.extract_strided_slice %6 {offsets = [0, 0, 128], sizes = [1, 8, 128], strides = [1, 1, 1]} : vector<1x8x384xbf16> to vector<1x8x128xbf16>
    %9 = vector.extract_strided_slice %6 {offsets = [0, 0, 256], sizes = [1, 8, 128], strides = [1, 1, 1]} : vector<1x8x384xbf16> to vector<1x8x128xbf16>
    "tpu.trace_start"() <{level = 10 : i32, message = "bqd,bkd->bqk"}> : () -> ()
    %cst_4 = arith.constant dense<0.000000e+00> : vector<1x8x8xf32>
    %10 = tpu.matmul %7, %8, %cst_4 {dimension_numbers = #tpu.dot_dimension_numbers<[2], [2], [1], [1], [0, 0, 0, 1, 1, 1], [0], [0]>} : vector<1x8x128xbf16>, vector<1x8x128xbf16>, vector<1x8x8xf32> -> vector<1x8x8xf32>
    "tpu.trace_stop"() : () -> ()
    %cst_5 = arith.constant dense<0xFF800000> : vector<1x8xf32>
    %11 = vector.multi_reduction <maximumf>, %10, %cst_5 [2] : vector<1x8x8xf32> to vector<1x8xf32>
    %12 = vector.shape_cast %11 : vector<1x8xf32> to vector<1x8x1xf32>
    %13 = vector.broadcast %12 : vector<1x8x1xf32> to vector<1x8x8xf32>
    %14 = arith.subf %10, %13 : vector<1x8x8xf32>
    %15 = math.exp %14 : vector<1x8x8xf32>
    %cst_6 = arith.constant dense<0.000000e+00> : vector<1x8xf32>
    %16 = vector.multi_reduction <add>, %15, %cst_6 [2] : vector<1x8x8xf32> to vector<1x8xf32>
    %17 = vector.shape_cast %16 : vector<1x8xf32> to vector<1x8x1xf32>
    %18 = tpu.reciprocal %17 {approx = true} : vector<1x8x1xf32> -> vector<1x8x1xf32>
    %19 = vector.broadcast %18 : vector<1x8x1xf32> to vector<1x8x8xf32>
    %20 = arith.mulf %15, %19 : vector<1x8x8xf32>
    %21 = arith.truncf %20 : vector<1x8x8xf32> to vector<1x8x8xbf16>
    "tpu.trace_start"() <{level = 10 : i32, message = "bqk,bkd->bqd"}> : () -> ()
    %cst_7 = arith.constant dense<0.000000e+00> : vector<1x8x128xf32>
    %22 = tpu.matmul %21, %9, %cst_7 {dimension_numbers = #tpu.dot_dimension_numbers<[2], [1], [1], [2], [0, 0, 0, 1, 1, 2], [0], [0]>} : vector<1x8x8xbf16>, vector<1x8x128xbf16>, vector<1x8x128xf32> -> vector<1x8x128xf32>
    "tpu.trace_stop"() : () -> ()
    %23 = vector.shape_cast %22 : vector<1x8x128xf32> to vector<8x128xf32>
    %24 = arith.truncf %23 : vector<8x128xf32> to vector<8x128xbf16>
    %c0_8 = arith.constant 0 : index
    %c0_9 = arith.constant 0 : index
    %25 = vector.load %arg3[%c0_8, %c0_9] : memref<128x128xbf16, #tpu.memory_space<vmem>>, vector<128x128xbf16>
    %cst_10 = arith.constant dense<0.000000e+00> : vector<8x128xf32>
    %26 = tpu.matmul %24, %25, %cst_10 {dimension_numbers = #tpu.dot_dimension_numbers<[1], [0], [0], [1], [0, 0, 1, 1], [], []>} : vector<8x128xbf16>, vector<128x128xbf16>, vector<8x128xf32> -> vector<8x128xf32>
    %27 = vector.shape_cast %26 : vector<8x128xf32> to vector<1x8x128xf32>
    %c0_11 = arith.constant 0 : index
    %c0_12 = arith.constant 0 : index
    %c0_13 = arith.constant 0 : index
    %28 = vector.load %arg4[%c0_11, %c0_12, %c0_13] : memref<1x8x128xf32, #tpu.memory_space<vmem>>, vector<1x8x128xf32>
    tpu.vector_store %arg4[%c0_11, %c0_12, %c0_13], %27 {strides = array<i32>} : memref<1x8x128xf32, #tpu.memory_space<vmem>>, vector<1x8x128xf32>,
    return
  }
  func.func @transform_0(%arg0: i32) -> (i32, i32, i32) {
    %c0_i32 = arith.constant 0 : i32
    %c0_i32_0 = arith.constant 0 : i32
    %c0_i32_1 = arith.constant 0 : i32
    return %arg0, %c0_i32, %c0_i32_0 : i32, i32, i32
  }
  func.func @transform_1(%arg0: i32) -> (i32, i32) {
    %c0_i32 = arith.constant 0 : i32
    %c0_i32_0 = arith.constant 0 : i32
    %c0_i32_1 = arith.constant 0 : i32
    return %c0_i32, %c0_i32_0 : i32, i32
  }
  func.func @transform_2(%arg0: i32) -> (i32, i32) {
    %c0_i32 = arith.constant 0 : i32
    %c0_i32_0 = arith.constant 0 : i32
    %c0_i32_1 = arith.constant 0 : i32
    return %c0_i32, %c0_i32_0 : i32, i32
  }
  func.func @transform_3(%arg0: i32) -> (i32, i32, i32) {
    %c0_i32 = arith.constant 0 : i32
    %c0_i32_0 = arith.constant 0 : i32
    %c0_i32_1 = arith.constant 0 : i32
    return %arg0, %c0_i32, %c0_i32_0 : i32, i32, i32
  }
}

module attributes {stable_mosaic.version = 11 : i64} {
  func.func @_encoder_layer_kernel(%arg0: i32, %arg1: memref<1x8x128xf32, #tpu.memory_space<vmem>>, %arg2: memref<128x384xbf16, #tpu.memory_space<vmem>>, %arg3: memref<128x128xbf16, #tpu.memory_space<vmem>>, %arg4: memref<1x8x128xf32, #tpu.memory_space<vmem>>) attributes {dimension_semantics = [#tpu.dimension_semantics<parallel>], iteration_bounds = array<i64: 2>, scalar_prefetch = 0 : i64, scratch_operands = 0 : i64, tpu.core_type = #tpu.core_type<tc>, window_params = [{transform_indices = @transform_0, window_bounds = array<i64: 1, 8, 128>}, {pipeline_mode = #tpu.pipeline_mode<synchronous>, transform_indices = @transform_1, window_bounds = array<i64: 128, 384>}, {pipeline_mode = #tpu.pipeline_mode<synchronous>, transform_indices = @transform_2, window_bounds = array<i64: 128, 128>}, {transform_indices = @transform_3, window_bounds = array<i64: 1, 8, 128>}]} {
    %c0 = arith.constant 0 : index
    %c0_0 = arith.constant 0 : index
    %c0_1 = arith.constant 0 : index
    %0 = vector.load %arg1[%c0, %c0_0, %c0_1] : memref<1x8x128xf32, #tpu.memory_space<vmem>>, vector<1x8x128xf32>
    %1 = arith.truncf %0 : vector<1x8x128xf32> to vector<1x8x128xbf16>
    %2 = vector.shape_cast %1 : vector<1x8x128xbf16> to vector<8x128xbf16>
    %c0_2 = arith.constant 0 : index
    %c0_3 = arith.constant 0 : index
    %3 = vector.load %arg2[%c0_2, %c0_3] : memref<128x384xbf16, #tpu.memory_space<vmem>>, vector<128x384xbf16>
    %cst = arith.constant dense<0.000000e+00> : vector<8x384xf32>
    %4 = tpu.matmul %2, %3, %cst {dimension_numbers = #tpu.dot_dimension_numbers<[1], [0], [0], [1], [0, 0, 1, 1], [], []>} : vector<8x128xbf16>, vector<128x384xbf16>, vector<8x384xf32> -> vector<8x384xf32>
    %5 = arith.truncf %4 : vector<8x384xf32> to vector<8x384xbf16>
    %6 = vector.shape_cast %5 : vector<8x384xbf16> to vector<1x8x384xbf16>
    %7 = vector.extract_strided_slice %6 {offsets = [0, 0, 0], sizes = [1, 8, 128], strides = [1, 1, 1]} : vector<1x8x384xbf16> to vector<1x8x128xbf16>
    %8 = vector.extract_strided_slice %6 {offsets = [0, 0, 128], sizes = [1, 8, 128], strides = [1, 1, 1]} : vector<1x8x384xbf16> to vector<1x8x128xbf16>
    %9 = vector.extract_strided_slice %6 {offsets = [0, 0, 256], sizes = [1, 8, 128], strides = [1, 1, 1]} : vector<1x8x384xbf16> to vector<1x8x128xbf16>
    "tpu.trace_start"() <{level = 10 : i32, message = "bqd,bkd->bqk"}> : () -> ()
    %cst_4 = arith.constant dense<0.000000e+00> : vector<1x8x8xf32>
    %10 = tpu.matmul %7, %8, %cst_4 {dimension_numbers = #tpu.dot_dimension_numbers<[2], [2], [1], [1], [0, 0, 0, 1, 1, 1], [0], [0]>} : vector<1x8x128xbf16>, vector<1x8x128xbf16>, vector<1x8x8xf32> -> vector<1x8x8xf32>
    "tpu.trace_stop"() : () -> ()
    %cst_5 = arith.constant dense<0xFF800000> : vector<1x8xf32>
    %11 = vector.multi_reduction <maximumf>, %10, %cst_5 [2] : vector<1x8x8xf32> to vector<1x8xf32>
    %12 = vector.shape_cast %11 : vector<1x8xf32> to vector<1x8x1xf32>
    %13 = vector.broadcast %12 : vector<1x8x1xf32> to vector<1x8x8xf32>
    %14 = arith.subf %10, %13 : vector<1x8x8xf32>
    %15 = math.exp %14 : vector<1x8x8xf32>
    %cst_6 = arith.constant dense<0.000000e+00> : vector<1x8xf32>
    %16 = vector.multi_reduction <add>, %15, %cst_6 [2] : vector<1x8x8xf32> to vector<1x8xf32>
    %17 = vector.shape_cast %16 : vector<1x8xf32> to vector<1x8x1xf32>
    %18 = tpu.reciprocal %17 {approx = true} : vector<1x8x1xf32> -> vector<1x8x1xf32>
    %19 = vector.broadcast %18 : vector<1x8x1xf32> to vector<1x8x8xf32>
    %20 = arith.mulf %15, %19 : vector<1x8x8xf32>
    %21 = arith.truncf %20 : vector<1x8x8xf32> to vector<1x8x8xbf16>
    "tpu.trace_start"() <{level = 10 : i32, message = "bqk,bkd->bqd"}> : () -> ()
    %cst_7 = arith.constant dense<0.000000e+00> : vector<1x8x128xf32>
    %22 = tpu.matmul %21, %9, %cst_7 {dimension_numbers = #tpu.dot_dimension_numbers<[2], [1], [1], [2], [0, 0, 0, 1, 1, 2], [0], [0]>} : vector<1x8x8xbf16>, vector<1x8x128xbf16>, vector<1x8x128xf32> -> vector<1x8x128xf32>
    "tpu.trace_stop"() : () -> ()
    %23 = vector.shape_cast %22 : vector<1x8x128xf32> to vector<8x128xf32>
    %24 = arith.truncf %23 : vector<8x128xf32> to vector<8x128xbf16>
    %c0_8 = arith.constant 0 : index
    %c0_9 = arith.constant 0 : index
    %25 = vector.load %arg3[%c0_8, %c0_9] : memref<128x128xbf16, #tpu.memory_space<vmem>>, vector<128x128xbf16>
    %cst_10 = arith.constant dense<0.000000e+00> : vector<8x128xf32>
    %26 = tpu.matmul %24, %25, %cst_10 {dimension_numbers = #tpu.dot_dimension_numbers<[1], [0], [0], [1], [0, 0, 1, 1], [], []>} : vector<8x128xbf16>, vector<128x128xbf16>, vector<8x128xf32> -> vector<8x128xf32>
    %27 = vector.shape_cast %26 : vector<8x128xf32> to vector<1x8x128xf32>
    %c0_11 = arith.constant 0 : index
    %c0_12 = arith.constant 0 : index
    %c0_13 = arith.constant 0 : index
    %28 = vector.load %arg4[%c0_11, %c0_12, %c0_13] : memref<1x8x128xf32, #tpu.memory_space<vmem>>, vector<1x8x128xf32>
    tpu.vector_store %arg4[%c0_11, %c0_12, %c0_13], %27 {strides = array<i32>} : memref<1x8x128xf32, #tpu.memory_space<vmem>>, vector<1x8x128xf32>,
    return
  }
  func.func @transform_0(%arg0: i32) -> (i32, i32, i32) {
    %c0_i32 = arith.constant 0 : i32
    %c0_i32_0 = arith.constant 0 : i32
    %c0_i32_1 = arith.constant 0 : i32
    return %arg0, %c0_i32, %c0_i32_0 : i32, i32, i32
  }
  func.func @transform_1(%arg0: i32) -> (i32, i32) {
    %c0_i32 = arith.constant 0 : i32
    %c0_i32_0 = arith.constant 0 : i32
    %c0_i32_1 = arith.constant 0 : i32
    return %c0_i32, %c0_i32_0 : i32, i32
  }
  func.func @transform_2(%arg0: i32) -> (i32, i32) {
    %c0_i32 = arith.constant 0 : i32
    %c0_i32_0 = arith.constant 0 : i32
    %c0_i32_1 = arith.constant 0 : i32
    return %c0_i32, %c0_i32_0 : i32, i32
  }
  func.func @transform_3(%arg0: i32) -> (i32, i32, i32) {
    %c0_i32 = arith.constant 0 : i32
    %c0_i32_0 = arith.constant 0 : i32
    %c0_i32_1 = arith.constant 0 : i32
    return %arg0, %c0_i32, %c0_i32_0 : i32, i32, i32
  }
}

</mosaic_0001>

<llo_original>
// kernel: tpu_custom_call.1
$region0: #{tpu_custom_call.1}
  #allocation0 [shape = 'u32[]', space=smem, size = 0x4, offset = 0x4, fixed_abs, tag = 'smem constant byte address 0x4 - core index']
  #allocation1 [shape = 'u32[144,128]{1,0:T(1,128)}', space=vmem, size = 0x12000, scoped, tag = 'internal scratch']
  %s0 = inlined_call_operand.hbm [shape: f32[2,8,128], index: 0, kind: input, shape index: {}]
  %s1 = inlined_call_operand.hbm [shape: bf16[128,384], index: 1, kind: input, shape index: {}]
  %s2 = inlined_call_operand.hbm [shape: bf16[128,128], index: 2, kind: input, shape index: {}]
  %s3 = inlined_call_operand.hbm [shape: f32[2,8,128], index: 3, kind: output, shape index: {}]
  %s4 = sld [smem:[#allocation0]]
  $region57: #{tpu_custom_call.1} parent=0
    _
  %s6 = ssub.s32 1, %s4
  %s7 = scalar_select 0, %s6, %s4
  $region1: #{tpu_custom_call.1} parent=0
    #allocation2 [shape = 'u8[8192]{0}', space=vmem, size = 0x2000, scoped, tag = 'input window, operand 0']
    #allocation3 [shape = 's32[2]{0}', space=sflag, size = 0x8, scoped, tag = 'scoped memory for tpu_custom_call.1']
    #allocation4 [shape = 's32[2]{0}', space=sflag, size = 0x8, scoped, tag = 'scoped memory for tpu_custom_call.1']
    #allocation5 [shape = 'u8[98304]{0}', space=vmem, size = 0x18000, scoped, tag = 'input window, operand 1, single buffered']
    #allocation6 [shape = 's32[1]{0}', space=sflag, size = 0x4, scoped, tag = 'scoped memory for tpu_custom_call.1']
    #allocation7 [shape = 'u8[32768]{0}', space=vmem, size = 0x8000, scoped, tag = 'input window, operand 2, single buffered']
    #allocation8 [shape = 'u8[8192]{0}', space=vmem, size = 0x2000, scoped, tag = 'output window, operand 0']
    %8 = vsyncpa [#allocation3], 0
    %s9 = scalar_lea.sflag [#allocation3], 1
    %10 = vsyncpa %s9, 0
    %11 = vsyncpa [#allocation6], 0
    %12 = vsyncpa [#allocation4], 0
    %s13 = scalar_lea.sflag [#allocation4], 1
    %14 = vsyncpa %s13, 0
    loop: start=0, step=1, limit=4
    $region2: #{tpu_custom_call.1} parent=1 // loop_pre_header
      _
    $region3: #{tpu_custom_call.1} parent=1 // loop_header
      %s16 = sphi 0, %s20
      %p17 = scmp.ge.s32.totalorder %s16, 4
      %s26 = sphi 0, %s28
      %s29 = sphi 0, %s26
      %s30 = sphi 0, %s29
      %s46 = sphi 0, %s30
      %s50 = sphi 0, %s50
      %s52 = sphi 0, %s50
      %s53 = sphi 0, %s52
      %s67 = sphi 0, %s53
      %s71 = sphi 0, %s71
      %s73 = sphi 0, %s71
      %s74 = sphi 0, %s73
      %s88 = sphi 0, %s74
      %s94 = sphi 0, %s96
      %s97 = sphi 0, %s94
      %s98 = sphi 0, %s97
      %s114 = sphi 0, %s98
    $region4: #{tpu_custom_call.1} parent=1 // loop_header_branch
      %19 = sbr.rel (%p17) target = $region8
    $region5: #{tpu_custom_call.1} parent=1 // loop_body
      %s21 = ssub.s32 %s16, 1
      %s22 = ssub.s32 %s16, 2
      %s23 = sadd.s32 %s16, 1
      %s24 = ssub.s32 %s16, %s23
      %p25 = scmp.eq.s32.totalorder %s24, 0
      %s27 = sadd.s32 %s26, 1
      %s28 = scalar_select %p25, %s26, %s27
      %p31 = pneg %p25
      %p32 = scmp.eq.s32.totalorder %s16, 1
      %p33 = por %p31, %p32
      %p34 = scmp.ne.s32.totalorder %s26, %s29
      %p35 = scmp.eq.s32.totalorder %s16, 0
      %p36 = por %p34, %p35
      %p37 = scmp.ne.s32.totalorder %s26, %s29
      %p38 = scmp.eq.s32.totalorder %s21, 1
      %p39 = por %p37, %p38
      %p40 = scmp.ne.s32.totalorder %s29, %s30
      %p41 = scmp.eq.s32.totalorder %s21, 0
      %p42 = por %p40, %p41
      %p43 = scmp.ne.s32.totalorder %s29, %s30
      %p44 = scmp.eq.s32.totalorder %s22, 1
      %p45 = por %p43, %p44
      %p47 = scmp.ne.s32.totalorder %s30, %s46
      %p48 = scmp.eq.s32.totalorder %s22, 0
      %p49 = por %p47, %p48
      %s51 = sadd.s32 %s50, 1
      %p54 = scmp.eq.s32.totalorder %s16, 1
      %p55 = scmp.ne.s32.totalorder %s50, %s52
      %p56 = scmp.eq.s32.totalorder %s16, 0
      %p57 = por %p55, %p56
      %p58 = scmp.ne.s32.totalorder %s50, %s52
      %p59 = scmp.eq.s32.totalorder %s21, 1
      %p60 = por %p58, %p59
      %p61 = scmp.ne.s32.totalorder %s52, %s53
      %p62 = scmp.eq.s32.totalorder %s21, 0
      %p63 = por %p61, %p62
      %p64 = scmp.ne.s32.totalorder %s52, %s53
      %p65 = scmp.eq.s32.totalorder %s22, 1
      %p66 = por %p64, %p65
      %p68 = scmp.ne.s32.totalorder %s53, %s67
      %p69 = scmp.eq.s32.totalorder %s22, 0
      %p70 = por %p68, %p69
      %s72 = sadd.s32 %s71, 1
      %p75 = scmp.eq.s32.totalorder %s16, 1
      %p76 = scmp.ne.s32.totalorder %s71, %s73
      %p77 = scmp.eq.s32.totalorder %s16, 0
      %p78 = por %p76, %p77
      %p79 = scmp.ne.s32.totalorder %s71, %s73
      %p80 = scmp.eq.s32.totalorder %s21, 1
      %p81 = por %p79, %p80
      %p82 = scmp.ne.s32.totalorder %s73, %s74
      %p83 = scmp.eq.s32.totalorder %s21, 0
      %p84 = por %p82, %p83
      %p85 = scmp.ne.s32.totalorder %s73, %s74
      %p86 = scmp.eq.s32.totalorder %s22, 1
      %p87 = por %p85, %p86
      %p89 = scmp.ne.s32.totalorder %s74, %s88
      %p90 = scmp.eq.s32.totalorder %s22, 0
      %p91 = por %p89, %p90
      %s92 = ssub.s32 %s16, %s23
      %p93 = scmp.eq.s32.totalorder %s92, 0
      %s95 = sadd.s32 %s94, 1
      %s96 = scalar_select %p93, %s94, %s95
      %p99 = pneg %p93
      %p100 = scmp.eq.s32.totalorder %s16, 1
      %p101 = por %p99, %p100
      %p102 = scmp.ne.s32.totalorder %s94, %s97
      %p103 = scmp.eq.s32.totalorder %s16, 0
      %p104 = por %p102, %p103
      %p105 = scmp.ne.s32.totalorder %s94, %s97
      %p106 = scmp.eq.s32.totalorder %s21, 1
      %p107 = por %p105, %p106
      %p108 = scmp.ne.s32.totalorder %s97, %s98
      %p109 = scmp.eq.s32.totalorder %s21, 0
      %p110 = por %p108, %p109
      %p111 = scmp.ne.s32.totalorder %s97, %s98
      %p112 = scmp.eq.s32.totalorder %s22, 1
      %p113 = por %p111, %p112
      %p115 = scmp.ne.s32.totalorder %s98, %s114
      %p116 = scmp.eq.s32.totalorder %s22, 0
      %p117 = por %p115, %p116
      %p118 = scmp.le.s32.totalorder 1, %s16
      %p119 = scmp.lt.s32.totalorder %s16, 3
      %p120 = pnand %p118, %p119
      %p121 = pneg %p120
      // Predicated region
      $region9: #{tpu_custom_call.1} parent=5 // pred_check
        _
      $region10: #{tpu_custom_call.1} parent=5 // pred_check_branch
        %123 = sbr.rel (%p120) target = $region12
      $region11: #{tpu_custom_call.1} parent=5 // pred_region
        %s124 = ssub.s32 %s16, 1
        // Predicated region
        $region13: #{tpu_custom_call.1} parent=11 // pred_check
          %p125 = pneg %p63
        $region14: #{tpu_custom_call.1} parent=11 // pred_check_branch
          %127 = sbr.rel (%p125) target = $region16
        $region15: #{tpu_custom_call.1} parent=11 // pred_region
          %s129 = ssub.s32 3072, 3072
          %130 = vsyncadd [#allocation6], %s129
          %s131 = sshll.u32 [#allocation5], 4
          %s132 = int_to_ptr.vmem [resolvable:$true] %s131
          %137 = dma.hbm_to_vmem [thread:$0]  %s1, 3072, %s132, [#allocation6], 192, 192, 12
        $region16: #{tpu_custom_call.1} parent=11 // pred_fallthru
          _
        // Predicated region
        $region17: #{tpu_custom_call.1} parent=11 // pred_check
          %p138 = pneg %p84
        $region18: #{tpu_custom_call.1} parent=11 // pred_check_branch
          %140 = sbr.rel (%p138) target = $region20
        $region19: #{tpu_custom_call.1} parent=11 // pred_region
          %s142 = ssub.s32 1024, 1024
          %143 = vsyncadd [#allocation6], %s142
          %s144 = sshll.u32 [#allocation7], 4
          %s145 = int_to_ptr.vmem [resolvable:$true] %s144
          %150 = dma.hbm_to_vmem [thread:$0]  %s2, 1024, %s145, [#allocation6], 64, 64, 4
        $region20: #{tpu_custom_call.1} parent=11 // pred_fallthru
          _
      $region12: #{tpu_custom_call.1} parent=5 // pred_fallthru
        _
      %p151 = scmp.lt.s32.totalorder %s16, 2
      // Predicated region
      $region21: #{tpu_custom_call.1} parent=5 // pred_check
        %p152 = pneg %p151
      $region22: #{tpu_custom_call.1} parent=5 // pred_check_branch
        %154 = sbr.rel (%p152) target = $region24
      $region23: #{tpu_custom_call.1} parent=5 // pred_region
        // Predicated region
        $region25: #{tpu_custom_call.1} parent=23 // pred_check
          %p155 = pneg %p36
        $region26: #{tpu_custom_call.1} parent=23 // pred_check_branch
          %157 = sbr.rel (%p155) target = $region28
        $region27: #{tpu_custom_call.1} parent=23 // pred_region
          %s158 = sand.u32 %s26, 1
          %s159 = scalar_lea.sflag [#allocation3], %s158
          %s160 = sand.u32 %s26, 1
          %s161 = smul.addr %s160, 8
          %s162 = scalar_lea.vmem [#allocation2], %s161
          %s164 = ssub.s32 128, 128
          %165 = vsyncadd %s159, %s164
          %s166 = smul.addr %s16, 128
          %s167 = scalar_lea.hbm %s0, %s166
          %s169 = sshll.u32 %s162, 4
          %s170 = int_to_ptr.vmem [resolvable:$true] %s169
          %172 = dma.hbm_to_vmem [thread:$0]  %s167, 128, %s170, %s159
        $region28: #{tpu_custom_call.1} parent=23 // pred_fallthru
          _
      $region24: #{tpu_custom_call.1} parent=5 // pred_fallthru
        _
      %p173 = scmp.le.s32.totalorder 1, %s16
      %p174 = scmp.lt.s32.totalorder %s16, 3
      %p175 = pnand %p173, %p174
      %p176 = pneg %p175
      // Predicated region
      $region29: #{tpu_custom_call.1} parent=5 // pred_check
        _
      $region30: #{tpu_custom_call.1} parent=5 // pred_check_branch
        %178 = sbr.rel (%p175) target = $region32
      $region31: #{tpu_custom_call.1} parent=5 // pred_region
        %s179 = ssub.s32 %s16, 1
        %s180 = sand.u32 %s29, 1
        %s181 = scalar_lea.sflag [#allocation3], %s180
        %s182 = sand.u32 %s29, 1
        %s183 = smul.addr %s182, 8
        %s184 = scalar_lea.vmem [#allocation2], %s183
        // Predicated region
        $region33: #{tpu_custom_call.1} parent=31 // pred_check
          %p185 = pneg %p42
        $region34: #{tpu_custom_call.1} parent=31 // pred_check_branch
          %187 = sbr.rel (%p185) target = $region36
        $region35: #{tpu_custom_call.1} parent=31 // pred_region
          %188 = dma.done %s181, 128
        $region36: #{tpu_custom_call.1} parent=31 // pred_fallthru
          _
        // Predicated region
        $region37: #{tpu_custom_call.1} parent=31 // pred_check
          %p189 = pneg %p63
        $region38: #{tpu_custom_call.1} parent=31 // pred_check_branch
          %191 = sbr.rel (%p189) target = $region40
        $region39: #{tpu_custom_call.1} parent=31 // pred_region
          %192 = dma.done [#allocation6], 3072
        $region40: #{tpu_custom_call.1} parent=31 // pred_fallthru
          _
        // Predicated region
        $region41: #{tpu_custom_call.1} parent=31 // pred_check
          %p193 = pneg %p84
        $region42: #{tpu_custom_call.1} parent=31 // pred_check_branch
          %195 = sbr.rel (%p193) target = $region44
        $region43: #{tpu_custom_call.1} parent=31 // pred_region
          %196 = dma.done [#allocation6], 1024
        $region44: #{tpu_custom_call.1} parent=31 // pred_fallthru
          _
        %s197 = sand.u32 %s29, 1
        %s198 = scalar_lea.sflag [#allocation3], %s197
        %s199 = sand.u32 %s29, 1
        %s200 = smul.addr %s199, 8
        %s201 = scalar_lea.vmem [#allocation2], %s200
        %p202 = pneg %p42
        %p203 = pneg %p39
        %p204 = pneg %p63
        %p205 = pneg %p60
        %p206 = pneg %p84
        %p207 = pneg %p81
        %p208 = pneg %p110
        %p209 = pneg %p107
        %s210 = sand.u32 %s97, 1
        %s211 = scalar_lea.sflag [#allocation4], %s210
        %s212 = sand.u32 %s97, 1
        %s213 = smul.addr %s212, 8
        %s214 = scalar_lea.vmem [#allocation8], %s213
        %v216 = vld [vmem:[%s184] sm:$0xff]
        %v217 = vpack.c.bf16 %v216, %v216
        %v218 = vld [vmem:[#allocation5] sm:$0xff]
        %v219 = vld [vmem:[#allocation5 + $0x8] sm:$0xf]
        %v220 = vld [vmem:[#allocation5 + $0xc] sm:$0xff]
        %v221 = vld [vmem:[#allocation5 + $0x14] sm:$0xf]
        %v222 = vld [vmem:[#allocation5 + $0x18] sm:$0xff]
        %v223 = vld [vmem:[#allocation5 + $0x20] sm:$0xf]
        %v224 = vld [vmem:[#allocation5 + $0x24] sm:$0xff]
        %v225 = vld [vmem:[#allocation5 + $0x2c] sm:$0xf]
        %v226 = vld [vmem:[#allocation5 + $0x30] sm:$0xff]
        %v227 = vld [vmem:[#allocation5 + $0x38] sm:$0xf]
        %v228 = vld [vmem:[#allocation5 + $0x3c] sm:$0xff]
        %v229 = vld [vmem:[#allocation5 + $0x44] sm:$0xf]
        %v230 = vld [vmem:[#allocation5 + $0x48] sm:$0xff]
        %v231 = vld [vmem:[#allocation5 + $0x50] sm:$0xf]
        %v232 = vld [vmem:[#allocation5 + $0x54] sm:$0xff]
        %v233 = vld [vmem:[#allocation5 + $0x5c] sm:$0xf]
        %v234 = vld [vmem:[#allocation5 + $0x60] sm:$0xff]
        %v235 = vld [vmem:[#allocation5 + $0x68] sm:$0xf]
        %v236 = vld [vmem:[#allocation5 + $0x6c] sm:$0xff]
        %v237 = vld [vmem:[#allocation5 + $0x74] sm:$0xf]
        %v238 = vld [vmem:[#allocation5 + $0x78] sm:$0xff]
        %v239 = vld [vmem:[#allocation5 + $0x80] sm:$0xf]
        %v240 = vld [vmem:[#allocation5 + $0x84] sm:$0xff]
        %v241 = vld [vmem:[#allocation5 + $0x8c] sm:$0xf]
        %v242 = vld [vmem:[#allocation5 + $0x90] sm:$0xff]
        %v243 = vld [vmem:[#allocation5 + $0x98] sm:$0xf]
        %v244 = vld [vmem:[#allocation5 + $0x9c] sm:$0xff]
        %v245 = vld [vmem:[#allocation5 + $0xa4] sm:$0xf]
        %v246 = vld [vmem:[#allocation5 + $0xa8] sm:$0xff]
        %v247 = vld [vmem:[#allocation5 + $0xb0] sm:$0xf]
        %v248 = vld [vmem:[#allocation5 + $0xb4] sm:$0xff]
        %v249 = vld [vmem:[#allocation5 + $0xbc] sm:$0xf]
        %v282 = vunpack.c.l.b16 %v218
        %v283 = vunpack.c.h.b16 %v218
        %v284 = vunpack.c.l.b16 %v219
        %v285 = vunpack.c.l.b16 %v220
        %v286 = vunpack.c.h.b16 %v220
        %v287 = vunpack.c.l.b16 %v221
        %v288 = vunpack.c.l.b16 %v222
        %v289 = vunpack.c.h.b16 %v222
        %v290 = vunpack.c.l.b16 %v223
        %v291 = vunpack.c.l.b16 %v224
        %v292 = vunpack.c.h.b16 %v224
        %v293 = vunpack.c.l.b16 %v225
        %v294 = vunpack.c.l.b16 %v226
        %v295 = vunpack.c.h.b16 %v226
        %v296 = vunpack.c.l.b16 %v227
        %v297 = vunpack.c.l.b16 %v228
        %v298 = vunpack.c.h.b16 %v228
        %v299 = vunpack.c.l.b16 %v229
        %v300 = vunpack.c.l.b16 %v230
        %v301 = vunpack.c.h.b16 %v230
        %v302 = vunpack.c.l.b16 %v231
        %v303 = vunpack.c.l.b16 %v232
        %v304 = vunpack.c.h.b16 %v232
        %v305 = vunpack.c.l.b16 %v233
        %v306 = vunpack.c.l.b16 %v234
        %v307 = vunpack.c.h.b16 %v234
        %v308 = vunpack.c.l.b16 %v235
        %v309 = vunpack.c.l.b16 %v236
        %v310 = vunpack.c.h.b16 %v236
        %v311 = vunpack.c.l.b16 %v237
        %v312 = vunpack.c.l.b16 %v238
        %v313 = vunpack.c.h.b16 %v238
        %v314 = vunpack.c.l.b16 %v239
        %v315 = vunpack.c.l.b16 %v240
        %v316 = vunpack.c.h.b16 %v240
        %v317 = vunpack.c.l.b16 %v241
        %v318 = vunpack.c.l.b16 %v242
        %v319 = vunpack.c.h.b16 %v242
        %v320 = vunpack.c.l.b16 %v243
        %v321 = vunpack.c.l.b16 %v244
        %v322 = vunpack.c.h.b16 %v244
        %v323 = vunpack.c.l.b16 %v245
        %v324 = vunpack.c.l.b16 %v246
        %v325 = vunpack.c.h.b16 %v246
        %v326 = vunpack.c.l.b16 %v247
        %v327 = vunpack.c.l.b16 %v248
        %v328 = vunpack.c.h.b16 %v248
        %v329 = vunpack.c.l.b16 %v249
        %v330 = vpack.c.b16 %v285, %v282
        %v331 = vpack.c.b16 %v286, %v283
        %v332 = vpack.c.b16 %v287, %v284
        %v333 = vpack.c.b16 %v291, %v288
        %v334 = vpack.c.b16 %v292, %v289
        %v335 = vpack.c.b16 %v293, %v290
        %v336 = vpack.c.b16 %v297, %v294
        %v337 = vpack.c.b16 %v298, %v295
        %v338 = vpack.c.b16 %v299, %v296
        %v339 = vpack.c.b16 %v303, %v300
        %v340 = vpack.c.b16 %v304, %v301
        %v341 = vpack.c.b16 %v305, %v302
        %v342 = vpack.c.b16 %v309, %v306
        %v343 = vpack.c.b16 %v310, %v307
        %v344 = vpack.c.b16 %v311, %v308
        %v345 = vpack.c.b16 %v315, %v312
        %v346 = vpack.c.b16 %v316, %v313
        %v347 = vpack.c.b16 %v317, %v314
        %v348 = vpack.c.b16 %v321, %v318
        %v349 = vpack.c.b16 %v322, %v319
        %v350 = vpack.c.b16 %v323, %v320
        %v351 = vpack.c.b16 %v327, %v324
        %v352 = vpack.c.b16 %v328, %v325
        %v353 = vpack.c.b16 %v329, %v326
        %378 = vmatprep.subr.bf16.mxu0 %v331
        %379 = vmatpush1.bf16.msra.mxu0 %v330
        %380 = vmatprep.subr.bf16.mxu0 %v334
        %381 = vmatpush1.bf16.msra.mxu0 %v333
        %382 = vmatprep.subr.bf16.mxu0 %v337
        %383 = vmatpush1.bf16.msra.mxu0 %v336
        %384 = vmatprep.subr.bf16.mxu0 %v340
        %385 = vmatpush1.bf16.msra.mxu0 %v339
        %386 = vmatprep.subr.bf16.mxu0 %v343
        %387 = vmatpush1.bf16.msra.mxu0 %v342
        %388 = vmatprep.subr.bf16.mxu0 %v346
        %389 = vmatpush1.bf16.msra.mxu0 %v345
        %390 = vmatprep.subr.bf16.mxu0 %v349
        %391 = vmatpush1.bf16.msra.mxu0 %v348
        %392 = vmatprep.subr.bf16.mxu0 %v352
        %393 = vmatpush1.bf16.msra.mxu0 %v351
        %394 = vmatprep.subr.bf16.mxu0 0
        %395 = vmatpush1.bf16.msra.mxu0 0
        %396 = vmatprep.subr.bf16.mxu0 0
        %397 = vmatpush1.bf16.msra.mxu0 0
        %398 = vmatprep.subr.bf16.mxu0 0
        %399 = vmatpush1.bf16.msra.mxu0 0
        %400 = vmatprep.subr.bf16.mxu0 0
        %401 = vmatpush1.bf16.msra.mxu0 0
        %402 = vmatprep.subr.bf16.mxu0 0
        %403 = vmatpush1.bf16.msra.mxu0 0
        %404 = vmatprep.subr.bf16.mxu0 0
        %405 = vmatpush1.bf16.msra.mxu0 0
        %406 = vmatprep.subr.bf16.mxu0 0
        %407 = vmatpush1.bf16.msra.mxu0 0
        %408 = vmatprep.subr.bf16.mxu0 0
        %409 = vmatpush1.bf16.msra.mxu0 0
        %410 = vmatprep.mubr.bf16.mxu0 0
        %411 = vmatmul.mubr.bf16.gmra.mrb[0].mxu0 %v217
        %v412 = vpop.f32.mrb[0].mxu0
        %v413 = vadd.f32 0.0, %v412
        %v414 = vpop.f32.mrb[0].mxu0
        %v415 = vadd.f32 0.0, %v414
        %v416 = vpop.f32.mrb[0].mxu0
        %v417 = vpop.f32.mrb[0].mxu0
        %418 = vdwg.mxu0
        %419 = vmatprep.subr.bf16.mxu0 0
        %420 = vmatpush1.bf16.msra.mxu0 %v332
        %421 = vmatprep.subr.bf16.mxu0 0
        %422 = vmatpush1.bf16.msra.mxu0 %v335
        %423 = vmatprep.subr.bf16.mxu0 0
        %424 = vmatpush1.bf16.msra.mxu0 %v338
        %425 = vmatprep.subr.bf16.mxu0 0
        %426 = vmatpush1.bf16.msra.mxu0 %v341
        %427 = vmatprep.subr.bf16.mxu0 0
        %428 = vmatpush1.bf16.msra.mxu0 %v344
        %429 = vmatprep.subr.bf16.mxu0 0
        %430 = vmatpush1.bf16.msra.mxu0 %v347
        %431 = vmatprep.subr.bf16.mxu0 0
        %432 = vmatpush1.bf16.msra.mxu0 %v350
        %433 = vmatprep.subr.bf16.mxu0 0
        %434 = vmatpush1.bf16.msra.mxu0 %v353
        %435 = vmatprep.subr.bf16.mxu0 0
        %436 = vmatpush1.bf16.msra.mxu0 0
        %437 = vmatprep.subr.bf16.mxu0 0
        %438 = vmatpush1.bf16.msra.mxu0 0
        %439 = vmatprep.subr.bf16.mxu0 0
        %440 = vmatpush1.bf16.msra.mxu0 0
        %441 = vmatprep.subr.bf16.mxu0 0
        %442 = vmatpush1.bf16.msra.mxu0 0
        %443 = vmatprep.subr.bf16.mxu0 0
        %444 = vmatpush1.bf16.msra.mxu0 0
        %445 = vmatprep.subr.bf16.mxu0 0
        %446 = vmatpush1.bf16.msra.mxu0 0
        %447 = vmatprep.subr.bf16.mxu0 0
        %448 = vmatpush1.bf16.msra.mxu0 0
        %449 = vmatprep.subr.bf16.mxu0 0
        %450 = vmatpush1.bf16.msra.mxu0 0
        %451 = vmatprep.mubr.bf16.mxu0 0
        %452 = vmatmul.mubr.bf16.gmra.mrb[0].mxu0 %v217
        %v453 = vpop.f32.mrb[0].mxu0
        %v454 = vadd.f32 0.0, %v453
        %v455 = vpop.f32.mrb[0].mxu0
        %v456 = vpop.f32.mrb[0].mxu0
        %v457 = vpop.f32.mrb[0].mxu0
        %458 = vdwg.mxu0
        %v459 = vpack.c.bf16 %v413, %v413
        %v460 = vpack.c.bf16 %v415, %v415
        %v461 = vpack.c.bf16 %v454, %v454
        %462 = vmatprep.subr.bf16.mxu0 0
        %463 = vmatpush1.bf16.xpose.msra.mxu0 %v460
        %464 = vmatprep.subr.bf16.mxu0 0
        %465 = vmatpush1.bf16.xpose.msra.mxu0 0
        %466 = vmatprep.subr.bf16.mxu0 0
        %467 = vmatpush1.bf16.xpose.msra.mxu0 0
        %468 = vmatprep.subr.bf16.mxu0 0
        %469 = vmatpush1.bf16.xpose.msra.mxu0 0
        %470 = vmatprep.subr.bf16.mxu0 0
        %471 = vmatpush1.bf16.xpose.msra.mxu0 0
        %472 = vmatprep.subr.bf16.mxu0 0
        %473 = vmatpush1.bf16.xpose.msra.mxu0 0
        %474 = vmatprep.subr.bf16.mxu0 0
        %475 = vmatpush1.bf16.xpose.msra.mxu0 0
        %476 = vmatprep.subr.bf16.mxu0 0
        %477 = vmatpush1.bf16.xpose.msra.mxu0 0
        %478 = vmatprep.subr.bf16.mxu0 0
        %479 = vmatpush1.bf16.xpose.msra.mxu0 0
        %480 = vmatprep.subr.bf16.mxu0 0
        %481 = vmatpush1.bf16.xpose.msra.mxu0 0
        %482 = vmatprep.subr.bf16.mxu0 0
        %483 = vmatpush1.bf16.xpose.msra.mxu0 0
        %484 = vmatprep.subr.bf16.mxu0 0
        %485 = vmatpush1.bf16.xpose.msra.mxu0 0
        %486 = vmatprep.subr.bf16.mxu0 0
        %487 = vmatpush1.bf16.xpose.msra.mxu0 0
        %488 = vmatprep.subr.bf16.mxu0 0
        %489 = vmatpush1.bf16.xpose.msra.mxu0 0
        %490 = vmatprep.subr.bf16.mxu0 0
        %491 = vmatpush1.bf16.xpose.msra.mxu0 0
        %492 = vmatprep.subr.bf16.mxu0 0
        %493 = vmatpush1.bf16.xpose.msra.mxu0 0
        %494 = vmatprep.mubr.bf16.mxu0 0
        %495 = vmatmul.mubr.bf16.gmra.mrb[0].mxu0 %v459
        %v496 = vpop.f32.mrb[0].mxu0
        %v497 = vadd.f32 0.0, %v496
        %v498 = vpop.f32.mrb[0].mxu0
        %v499 = vpop.f32.mrb[0].mxu0
        %v500 = vpop.f32.mrb[0].mxu0
        %501 = vdwg.mxu0
        %vm502 = vcmask 64512
        %v503 = vsel %vm502, %v497, -inf
        %504 = vmax.xlane.f32.xlu0 %v503
        %v505 = vpop.xlane.xlu0 %504
        %v506 = vsub.f32 %v497, %v505
        %v507 = vmul.f32 %v506, 1.442695
        %v508 = vpow.pop %v507
        %v509 = vsel %vm502, %v508, 0.0
        %510 = vadd.xlane.f32.xlu0 %v509
        %v511 = vpop.xlane.xlu0 %510
        %v512 = vrcp.pop %v511
        %v513 = vmul.f32 %v508, %v512
        %v514 = vpack.c.bf16 %v513, %v513
        %v516 = vsel %vm502, %v514, 0
        %vm518 = vcmask 1043456
        %v520 = vsel %vm518, %v461, 0
        %522 = vmatprep.subr.bf16.mxu0 0
        %523 = vmatpush1.bf16.msra.mxu0 %v520
        %524 = vmatprep.subr.bf16.mxu0 0
        %525 = vmatpush1.bf16.msra.mxu0 0
        %526 = vmatprep.subr.bf16.mxu0 0
        %527 = vmatpush1.bf16.msra.mxu0 0
        %528 = vmatprep.subr.bf16.mxu0 0
        %529 = vmatpush1.bf16.msra.mxu0 0
        %530 = vmatprep.subr.bf16.mxu0 0
        %531 = vmatpush1.bf16.msra.mxu0 0
        %532 = vmatprep.subr.bf16.mxu0 0
        %533 = vmatpush1.bf16.msra.mxu0 0
        %534 = vmatprep.subr.bf16.mxu0 0
        %535 = vmatpush1.bf16.msra.mxu0 0
        %536 = vmatprep.subr.bf16.mxu0 0
        %537 = vmatpush1.bf16.msra.mxu0 0
        %538 = vmatprep.subr.bf16.mxu0 0
        %539 = vmatpush1.bf16.msra.mxu0 0
        %540 = vmatprep.subr.bf16.mxu0 0
        %541 = vmatpush1.bf16.msra.mxu0 0
        %542 = vmatprep.subr.bf16.mxu0 0
        %543 = vmatpush1.bf16.msra.mxu0 0
        %544 = vmatprep.subr.bf16.mxu0 0
        %545 = vmatpush1.bf16.msra.mxu0 0
        %546 = vmatprep.subr.bf16.mxu0 0
        %547 = vmatpush1.bf16.msra.mxu0 0
        %548 = vmatprep.subr.bf16.mxu0 0
        %549 = vmatpush1.bf16.msra.mxu0 0
        %550 = vmatprep.subr.bf16.mxu0 0
        %551 = vmatpush1.bf16.msra.mxu0 0
        %552 = vmatprep.subr.bf16.mxu0 0
        %553 = vmatpush1.bf16.msra.mxu0 0
        %554 = vmatprep.mubr.bf16.mxu0 0
        %555 = vmatmul.mubr.bf16.gmra.mrb[0].mxu0 %v516
        %v556 = vpop.f32.mrb[0].mxu0
        %v557 = vadd.f32 0.0, %v556
        %v558 = vpop.f32.mrb[0].mxu0
        %v559 = vpop.f32.mrb[0].mxu0
        %v560 = vpop.f32.mrb[0].mxu0
        %561 = vdwg.mxu0
        %v562 = vpack.c.bf16 %v557, %v557
        %v563 = vld [vmem:[#allocation7] sm:$0xf]
        %v564 = vld [vmem:[#allocation7 + $0x4] sm:$0xf]
        %v565 = vld [vmem:[#allocation7 + $0x8] sm:$0xf]
        %v566 = vld [vmem:[#allocation7 + $0xc] sm:$0xf]
        %v567 = vld [vmem:[#allocation7 + $0x10] sm:$0xf]
        %v568 = vld [vmem:[#allocation7 + $0x14] sm:$0xf]
        %v569 = vld [vmem:[#allocation7 + $0x18] sm:$0xf]
        %v570 = vld [vmem:[#allocation7 + $0x1c] sm:$0xf]
        %v571 = vld [vmem:[#allocation7 + $0x20] sm:$0xf]
        %v572 = vld [vmem:[#allocation7 + $0x24] sm:$0xf]
        %v573 = vld [vmem:[#allocation7 + $0x28] sm:$0xf]
        %v574 = vld [vmem:[#allocation7 + $0x2c] sm:$0xf]
        %v575 = vld [vmem:[#allocation7 + $0x30] sm:$0xf]
        %v576 = vld [vmem:[#allocation7 + $0x34] sm:$0xf]
        %v577 = vld [vmem:[#allocation7 + $0x38] sm:$0xf]
        %v578 = vld [vmem:[#allocation7 + $0x3c] sm:$0xf]
        %v595 = vunpack.c.l.b16 %v563
        %v596 = vunpack.c.l.b16 %v564
        %v597 = vunpack.c.l.b16 %v565
        %v598 = vunpack.c.l.b16 %v566
        %v599 = vunpack.c.l.b16 %v567
        %v600 = vunpack.c.l.b16 %v568
        %v601 = vunpack.c.l.b16 %v569
        %v602 = vunpack.c.l.b16 %v570
        %v603 = vunpack.c.l.b16 %v571
        %v604 = vunpack.c.l.b16 %v572
        %v605 = vunpack.c.l.b16 %v573
        %v606 = vunpack.c.l.b16 %v574
        %v607 = vunpack.c.l.b16 %v575
        %v608 = vunpack.c.l.b16 %v576
        %v609 = vunpack.c.l.b16 %v577
        %v610 = vunpack.c.l.b16 %v578
        %v611 = vpack.c.b16 %v596, %v595
        %v612 = vpack.c.b16 %v598, %v597
        %v613 = vpack.c.b16 %v600, %v599
        %v614 = vpack.c.b16 %v602, %v601
        %v615 = vpack.c.b16 %v604, %v603
        %v616 = vpack.c.b16 %v606, %v605
        %v617 = vpack.c.b16 %v608, %v607
        %v618 = vpack.c.b16 %v610, %v609
        %627 = vmatprep.subr.bf16.mxu0 0
        %628 = vmatpush1.bf16.msra.mxu0 %v611
        %629 = vmatprep.subr.bf16.mxu0 0
        %630 = vmatpush1.bf16.msra.mxu0 %v612
        %631 = vmatprep.subr.bf16.mxu0 0
        %632 = vmatpush1.bf16.msra.mxu0 %v613
        %633 = vmatprep.subr.bf16.mxu0 0
        %634 = vmatpush1.bf16.msra.mxu0 %v614
        %635 = vmatprep.subr.bf16.mxu0 0
        %636 = vmatpush1.bf16.msra.mxu0 %v615
        %637 = vmatprep.subr.bf16.mxu0 0
        %638 = vmatpush1.bf16.msra.mxu0 %v616
        %639 = vmatprep.subr.bf16.mxu0 0
        %640 = vmatpush1.bf16.msra.mxu0 %v617
        %641 = vmatprep.subr.bf16.mxu0 0
        %642 = vmatpush1.bf16.msra.mxu0 %v618
        %643 = vmatprep.subr.bf16.mxu0 0
        %644 = vmatpush1.bf16.msra.mxu0 0
        %645 = vmatprep.subr.bf16.mxu0 0
        %646 = vmatpush1.bf16.msra.mxu0 0
        %647 = vmatprep.subr.bf16.mxu0 0
        %648 = vmatpush1.bf16.msra.mxu0 0
        %649 = vmatprep.subr.bf16.mxu0 0
        %650 = vmatpush1.bf16.msra.mxu0 0
        %651 = vmatprep.subr.bf16.mxu0 0
        %652 = vmatpush1.bf16.msra.mxu0 0
        %653 = vmatprep.subr.bf16.mxu0 0
        %654 = vmatpush1.bf16.msra.mxu0 0
        %655 = vmatprep.subr.bf16.mxu0 0
        %656 = vmatpush1.bf16.msra.mxu0 0
        %657 = vmatprep.subr.bf16.mxu0 0
        %658 = vmatpush1.bf16.msra.mxu0 0
        %659 = vmatprep.mubr.bf16.mxu0 0
        %660 = vmatmul.mubr.bf16.gmra.mrb[0].mxu0 %v562
        %v661 = vpop.f32.mrb[0].mxu0
        %v662 = vadd.f32 0.0, %v661
        %v663 = vpop.f32.mrb[0].mxu0
        %v664 = vpop.f32.mrb[0].mxu0
        %v665 = vpop.f32.mrb[0].mxu0
        %666 = vdwg.mxu0
        %667 = vst [vmem:[%s214] sm:$0xff] %v662
        %s668 = sand.u32 %s97, 1
        %s669 = scalar_lea.sflag [#allocation4], %s668
        %s670 = sand.u32 %s97, 1
        %s671 = smul.addr %s670, 8
        %s672 = scalar_lea.vmem [#allocation8], %s671
        // Predicated region
        $region45: #{tpu_custom_call.1} parent=31 // pred_check
          %p673 = pneg %p107
        $region46: #{tpu_custom_call.1} parent=31 // pred_check_branch
          %675 = sbr.rel (%p673) target = $region48
        $region47: #{tpu_custom_call.1} parent=31 // pred_region
          %s677 = ssub.s32 128, 128
          %678 = vsyncadd %s669, %s677
          %s679 = smul.addr %s21, 128
          %s680 = scalar_lea.hbm %s3, %s679
          %s682 = sshll.u32 %s672, 4
          %s683 = int_to_ptr.vmem [resolvable:$true] %s682
          %685 = dma.vmem_to_hbm [thread:$0]  %s683, 128, %s680, %s669
        $region48: #{tpu_custom_call.1} parent=31 // pred_fallthru
          _
      $region32: #{tpu_custom_call.1} parent=5 // pred_fallthru
        _
      %p686 = scmp.le.s32.totalorder 2, %s16
      // Predicated region
      $region49: #{tpu_custom_call.1} parent=5 // pred_check
        %p687 = pneg %p686
      $region50: #{tpu_custom_call.1} parent=5 // pred_check_branch
        %689 = sbr.rel (%p687) target = $region52
      $region51: #{tpu_custom_call.1} parent=5 // pred_region
        %s690 = ssub.s32 %s16, 2
        // Predicated region
        $region53: #{tpu_custom_call.1} parent=51 // pred_check
          %p691 = pneg %p113
        $region54: #{tpu_custom_call.1} parent=51 // pred_check_branch
          %693 = sbr.rel (%p691) target = $region56
        $region55: #{tpu_custom_call.1} parent=51 // pred_region
          %s694 = sand.u32 %s98, 1
          %s695 = scalar_lea.sflag [#allocation4], %s694
          %s696 = sand.u32 %s98, 1
          %s697 = smul.addr %s696, 8
          %s698 = scalar_lea.vmem [#allocation8], %s697
          %699 = dma.done %s695, 128
        $region56: #{tpu_custom_call.1} parent=51 // pred_fallthru
          _
      $region52: #{tpu_custom_call.1} parent=5 // pred_fallthru
        _
    $region6: #{tpu_custom_call.1} parent=1 // loop_footer
      %s20 = sadd.s32 1, %s16
    $region7: #{tpu_custom_call.1} parent=1 // loop_footer_branch
      %15 = sbr.rel target = $region3
    $region8: #{tpu_custom_call.1} parent=1 // loop_exit
      _
    %700 = vsyncpa [#allocation3], 1
    %s701 = scalar_lea.sflag [#allocation3], 1
    %702 = vsyncpa %s701, 1
    %703 = vsyncpa [#allocation6], 1
    %704 = vsyncpa [#allocation4], 1
    %s705 = scalar_lea.sflag [#allocation4], 1
    %706 = vsyncpa %s705, 1

// kernel: tpu_custom_call.1
$region0: #{tpu_custom_call.1}
  #allocation0 [shape = 'u32[]', space=smem, size = 0x4, offset = 0x4, fixed_abs, tag = 'smem constant byte address 0x4 - core index']
  #allocation1 [shape = 'u32[144,128]{1,0:T(1,128)}', space=vmem, size = 0x12000, scoped, tag = 'internal scratch']
  %s0 = inlined_call_operand.hbm [shape: f32[2,8,128], index: 0, kind: input, shape index: {}]
  %s1 = inlined_call_operand.hbm [shape: bf16[128,384], index: 1, kind: input, shape index: {}]
  %s2 = inlined_call_operand.hbm [shape: bf16[128,128], index: 2, kind: input, shape index: {}]
  %s3 = inlined_call_operand.hbm [shape: f32[2,8,128], index: 3, kind: output, shape index: {}]
  %s4 = sld [smem:[#allocation0]]
  $region57: #{tpu_custom_call.1} parent=0
    _
  %s6 = ssub.s32 1, %s4
  %s7 = scalar_select 0, %s6, %s4
  $region1: #{tpu_custom_call.1} parent=0
    #allocation2 [shape = 'u8[8192]{0}', space=vmem, size = 0x2000, scoped, tag = 'input window, operand 0']
    #allocation3 [shape = 's32[2]{0}', space=sflag, size = 0x8, scoped, tag = 'scoped memory for tpu_custom_call.1']
    #allocation4 [shape = 's32[2]{0}', space=sflag, size = 0x8, scoped, tag = 'scoped memory for tpu_custom_call.1']
    #allocation5 [shape = 'u8[98304]{0}', space=vmem, size = 0x18000, scoped, tag = 'input window, operand 1, single buffered']
    #allocation6 [shape = 's32[1]{0}', space=sflag, size = 0x4, scoped, tag = 'scoped memory for tpu_custom_call.1']
    #allocation7 [shape = 'u8[32768]{0}', space=vmem, size = 0x8000, scoped, tag = 'input window, operand 2, single buffered']
    #allocation8 [shape = 'u8[8192]{0}', space=vmem, size = 0x2000, scoped, tag = 'output window, operand 0']
    %8 = vsyncpa [#allocation3], 0
    %s9 = scalar_lea.sflag [#allocation3], 1
    %10 = vsyncpa %s9, 0
    %11 = vsyncpa [#allocation6], 0
    %12 = vsyncpa [#allocation4], 0
    %s13 = scalar_lea.sflag [#allocation4], 1
    %14 = vsyncpa %s13, 0
    loop: start=0, step=1, limit=4
    $region2: #{tpu_custom_call.1} parent=1 // loop_pre_header
      _
    $region3: #{tpu_custom_call.1} parent=1 // loop_header
      %s16 = sphi 0, %s20
      %p17 = scmp.ge.s32.totalorder %s16, 4
      %s26 = sphi 0, %s28
      %s29 = sphi 0, %s26
      %s30 = sphi 0, %s29
      %s46 = sphi 0, %s30
      %s50 = sphi 0, %s50
      %s52 = sphi 0, %s50
      %s53 = sphi 0, %s52
      %s67 = sphi 0, %s53
      %s71 = sphi 0, %s71
      %s73 = sphi 0, %s71
      %s74 = sphi 0, %s73
      %s88 = sphi 0, %s74
      %s94 = sphi 0, %s96
      %s97 = sphi 0, %s94
      %s98 = sphi 0, %s97
      %s114 = sphi 0, %s98
    $region4: #{tpu_custom_call.1} parent=1 // loop_header_branch
      %19 = sbr.rel (%p17) target = $region8
    $region5: #{tpu_custom_call.1} parent=1 // loop_body
      %s21 = ssub.s32 %s16, 1
      %s22 = ssub.s32 %s16, 2
      %s23 = sadd.s32 %s16, 1
      %s24 = ssub.s32 %s16, %s23
      %p25 = scmp.eq.s32.totalorder %s24, 0
      %s27 = sadd.s32 %s26, 1
      %s28 = scalar_select %p25, %s26, %s27
      %p31 = pneg %p25
      %p32 = scmp.eq.s32.totalorder %s16, 1
      %p33 = por %p31, %p32
      %p34 = scmp.ne.s32.totalorder %s26, %s29
      %p35 = scmp.eq.s32.totalorder %s16, 0
      %p36 = por %p34, %p35
      %p37 = scmp.ne.s32.totalorder %s26, %s29
      %p38 = scmp.eq.s32.totalorder %s21, 1
      %p39 = por %p37, %p38
      %p40 = scmp.ne.s32.totalorder %s29, %s30
      %p41 = scmp.eq.s32.totalorder %s21, 0
      %p42 = por %p40, %p41
      %p43 = scmp.ne.s32.totalorder %s29, %s30
      %p44 = scmp.eq.s32.totalorder %s22, 1
      %p45 = por %p43, %p44
      %p47 = scmp.ne.s32.totalorder %s30, %s46
      %p48 = scmp.eq.s32.totalorder %s22, 0
      %p49 = por %p47, %p48
      %s51 = sadd.s32 %s50, 1
      %p54 = scmp.eq.s32.totalorder %s16, 1
      %p55 = scmp.ne.s32.totalorder %s50, %s52
      %p56 = scmp.eq.s32.totalorder %s16, 0
      %p57 = por %p55, %p56
      %p58 = scmp.ne.s32.totalorder %s50, %s52
      %p59 = scmp.eq.s32.totalorder %s21, 1
      %p60 = por %p58, %p59
      %p61 = scmp.ne.s32.totalorder %s52, %s53
      %p62 = scmp.eq.s32.totalorder %s21, 0
      %p63 = por %p61, %p62
      %p64 = scmp.ne.s32.totalorder %s52, %s53
      %p65 = scmp.eq.s32.totalorder %s22, 1
      %p66 = por %p64, %p65
      %p68 = scmp.ne.s32.totalorder %s53, %s67
      %p69 = scmp.eq.s32.totalorder %s22, 0
      %p70 = por %p68, %p69
      %s72 = sadd.s32 %s71, 1
      %p75 = scmp.eq.s32.totalorder %s16, 1
      %p76 = scmp.ne.s32.totalorder %s71, %s73
      %p77 = scmp.eq.s32.totalorder %s16, 0
      %p78 = por %p76, %p77
      %p79 = scmp.ne.s32.totalorder %s71, %s73
      %p80 = scmp.eq.s32.totalorder %s21, 1
      %p81 = por %p79, %p80
      %p82 = scmp.ne.s32.totalorder %s73, %s74
      %p83 = scmp.eq.s32.totalorder %s21, 0
      %p84 = por %p82, %p83
      %p85 = scmp.ne.s32.totalorder %s73, %s74
      %p86 = scmp.eq.s32.totalorder %s22, 1
      %p87 = por %p85, %p86
      %p89 = scmp.ne.s32.totalorder %s74, %s88
      %p90 = scmp.eq.s32.totalorder %s22, 0
      %p91 = por %p89, %p90
      %s92 = ssub.s32 %s16, %s23
      %p93 = scmp.eq.s32.totalorder %s92, 0
      %s95 = sadd.s32 %s94, 1
      %s96 = scalar_select %p93, %s94, %s95
      %p99 = pneg %p93
      %p100 = scmp.eq.s32.totalorder %s16, 1
      %p101 = por %p99, %p100
      %p102 = scmp.ne.s32.totalorder %s94, %s97
      %p103 = scmp.eq.s32.totalorder %s16, 0
      %p104 = por %p102, %p103
      %p105 = scmp.ne.s32.totalorder %s94, %s97
      %p106 = scmp.eq.s32.totalorder %s21, 1
      %p107 = por %p105, %p106
      %p108 = scmp.ne.s32.totalorder %s97, %s98
      %p109 = scmp.eq.s32.totalorder %s21, 0
      %p110 = por %p108, %p109
      %p111 = scmp.ne.s32.totalorder %s97, %s98
      %p112 = scmp.eq.s32.totalorder %s22, 1
      %p113 = por %p111, %p112
      %p115 = scmp.ne.s32.totalorder %s98, %s114
      %p116 = scmp.eq.s32.totalorder %s22, 0
      %p117 = por %p115, %p116
      %p118 = scmp.le.s32.totalorder 1, %s16
      %p119 = scmp.lt.s32.totalorder %s16, 3
      %p120 = pnand %p118, %p119
      %p121 = pneg %p120
      // Predicated region
      $region9: #{tpu_custom_call.1} parent=5 // pred_check
        _
      $region10: #{tpu_custom_call.1} parent=5 // pred_check_branch
        %123 = sbr.rel (%p120) target = $region12
      $region11: #{tpu_custom_call.1} parent=5 // pred_region
        %s124 = ssub.s32 %s16, 1
        // Predicated region
        $region13: #{tpu_custom_call.1} parent=11 // pred_check
          %p125 = pneg %p63
        $region14: #{tpu_custom_call.1} parent=11 // pred_check_branch
          %127 = sbr.rel (%p125) target = $region16
        $region15: #{tpu_custom_call.1} parent=11 // pred_region
          %s129 = ssub.s32 3072, 3072
          %130 = vsyncadd [#allocation6], %s129
          %s131 = sshll.u32 [#allocation5], 4
          %s132 = int_to_ptr.vmem [resolvable:$true] %s131
          %137 = dma.hbm_to_vmem [thread:$0]  %s1, 3072, %s132, [#allocation6], 192, 192, 12
        $region16: #{tpu_custom_call.1} parent=11 // pred_fallthru
          _
        // Predicated region
        $region17: #{tpu_custom_call.1} parent=11 // pred_check
          %p138 = pneg %p84
        $region18: #{tpu_custom_call.1} parent=11 // pred_check_branch
          %140 = sbr.rel (%p138) target = $region20
        $region19: #{tpu_custom_call.1} parent=11 // pred_region
          %s142 = ssub.s32 1024, 1024
          %143 = vsyncadd [#allocation6], %s142
          %s144 = sshll.u32 [#allocation7], 4
          %s145 = int_to_ptr.vmem [resolvable:$true] %s144
          %150 = dma.hbm_to_vmem [thread:$0]  %s2, 1024, %s145, [#allocation6], 64, 64, 4
        $region20: #{tpu_custom_call.1} parent=11 // pred_fallthru
          _
      $region12: #{tpu_custom_call.1} parent=5 // pred_fallthru
        _
      %p151 = scmp.lt.s32.totalorder %s16, 2
      // Predicated region
      $region21: #{tpu_custom_call.1} parent=5 // pred_check
        %p152 = pneg %p151
      $region22: #{tpu_custom_call.1} parent=5 // pred_check_branch
        %154 = sbr.rel (%p152) target = $region24
      $region23: #{tpu_custom_call.1} parent=5 // pred_region
        // Predicated region
        $region25: #{tpu_custom_call.1} parent=23 // pred_check
          %p155 = pneg %p36
        $region26: #{tpu_custom_call.1} parent=23 // pred_check_branch
          %157 = sbr.rel (%p155) target = $region28
        $region27: #{tpu_custom_call.1} parent=23 // pred_region
          %s158 = sand.u32 %s26, 1
          %s159 = scalar_lea.sflag [#allocation3], %s158
          %s160 = sand.u32 %s26, 1
          %s161 = smul.addr %s160, 8
          %s162 = scalar_lea.vmem [#allocation2], %s161
          %s164 = ssub.s32 128, 128
          %165 = vsyncadd %s159, %s164
          %s166 = smul.addr %s16, 128
          %s167 = scalar_lea.hbm %s0, %s166
          %s169 = sshll.u32 %s162, 4
          %s170 = int_to_ptr.vmem [resolvable:$true] %s169
          %172 = dma.hbm_to_vmem [thread:$0]  %s167, 128, %s170, %s159
        $region28: #{tpu_custom_call.1} parent=23 // pred_fallthru
          _
      $region24: #{tpu_custom_call.1} parent=5 // pred_fallthru
        _
      %p173 = scmp.le.s32.totalorder 1, %s16
      %p174 = scmp.lt.s32.totalorder %s16, 3
      %p175 = pnand %p173, %p174
      %p176 = pneg %p175
      // Predicated region
      $region29: #{tpu_custom_call.1} parent=5 // pred_check
        _
      $region30: #{tpu_custom_call.1} parent=5 // pred_check_branch
        %178 = sbr.rel (%p175) target = $region32
      $region31: #{tpu_custom_call.1} parent=5 // pred_region
        %s179 = ssub.s32 %s16, 1
        %s180 = sand.u32 %s29, 1
        %s181 = scalar_lea.sflag [#allocation3], %s180
        %s182 = sand.u32 %s29, 1
        %s183 = smul.addr %s182, 8
        %s184 = scalar_lea.vmem [#allocation2], %s183
        // Predicated region
        $region33: #{tpu_custom_call.1} parent=31 // pred_check
          %p185 = pneg %p42
        $region34: #{tpu_custom_call.1} parent=31 // pred_check_branch
          %187 = sbr.rel (%p185) target = $region36
        $region35: #{tpu_custom_call.1} parent=31 // pred_region
          %188 = dma.done %s181, 128
        $region36: #{tpu_custom_call.1} parent=31 // pred_fallthru
          _
        // Predicated region
        $region37: #{tpu_custom_call.1} parent=31 // pred_check
          %p189 = pneg %p63
        $region38: #{tpu_custom_call.1} parent=31 // pred_check_branch
          %191 = sbr.rel (%p189) target = $region40
        $region39: #{tpu_custom_call.1} parent=31 // pred_region
          %192 = dma.done [#allocation6], 3072
        $region40: #{tpu_custom_call.1} parent=31 // pred_fallthru
          _
        // Predicated region
        $region41: #{tpu_custom_call.1} parent=31 // pred_check
          %p193 = pneg %p84
        $region42: #{tpu_custom_call.1} parent=31 // pred_check_branch
          %195 = sbr.rel (%p193) target = $region44
        $region43: #{tpu_custom_call.1} parent=31 // pred_region
          %196 = dma.done [#allocation6], 1024
        $region44: #{tpu_custom_call.1} parent=31 // pred_fallthru
          _
        %s197 = sand.u32 %s29, 1
        %s198 = scalar_lea.sflag [#allocation3], %s197
        %s199 = sand.u32 %s29, 1
        %s200 = smul.addr %s199, 8
        %s201 = scalar_lea.vmem [#allocation2], %s200
        %p202 = pneg %p42
        %p203 = pneg %p39
        %p204 = pneg %p63
        %p205 = pneg %p60
        %p206 = pneg %p84
        %p207 = pneg %p81
        %p208 = pneg %p110
        %p209 = pneg %p107
        %s210 = sand.u32 %s97, 1
        %s211 = scalar_lea.sflag [#allocation4], %s210
        %s212 = sand.u32 %s97, 1
        %s213 = smul.addr %s212, 8
        %s214 = scalar_lea.vmem [#allocation8], %s213
        %v216 = vld [vmem:[%s184] sm:$0xff]
        %v217 = vpack.c.bf16 %v216, %v216
        %v218 = vld [vmem:[#allocation5] sm:$0xff]
        %v219 = vld [vmem:[#allocation5 + $0x8] sm:$0xf]
        %v220 = vld [vmem:[#allocation5 + $0xc] sm:$0xff]
        %v221 = vld [vmem:[#allocation5 + $0x14] sm:$0xf]
        %v222 = vld [vmem:[#allocation5 + $0x18] sm:$0xff]
        %v223 = vld [vmem:[#allocation5 + $0x20] sm:$0xf]
        %v224 = vld [vmem:[#allocation5 + $0x24] sm:$0xff]
        %v225 = vld [vmem:[#allocation5 + $0x2c] sm:$0xf]
        %v226 = vld [vmem:[#allocation5 + $0x30] sm:$0xff]
        %v227 = vld [vmem:[#allocation5 + $0x38] sm:$0xf]
        %v228 = vld [vmem:[#allocation5 + $0x3c] sm:$0xff]
        %v229 = vld [vmem:[#allocation5 + $0x44] sm:$0xf]
        %v230 = vld [vmem:[#allocation5 + $0x48] sm:$0xff]
        %v231 = vld [vmem:[#allocation5 + $0x50] sm:$0xf]
        %v232 = vld [vmem:[#allocation5 + $0x54] sm:$0xff]
        %v233 = vld [vmem:[#allocation5 + $0x5c] sm:$0xf]
        %v234 = vld [vmem:[#allocation5 + $0x60] sm:$0xff]
        %v235 = vld [vmem:[#allocation5 + $0x68] sm:$0xf]
        %v236 = vld [vmem:[#allocation5 + $0x6c] sm:$0xff]
        %v237 = vld [vmem:[#allocation5 + $0x74] sm:$0xf]
        %v238 = vld [vmem:[#allocation5 + $0x78] sm:$0xff]
        %v239 = vld [vmem:[#allocation5 + $0x80] sm:$0xf]
        %v240 = vld [vmem:[#allocation5 + $0x84] sm:$0xff]
        %v241 = vld [vmem:[#allocation5 + $0x8c] sm:$0xf]
        %v242 = vld [vmem:[#allocation5 + $0x90] sm:$0xff]
        %v243 = vld [vmem:[#allocation5 + $0x98] sm:$0xf]
        %v244 = vld [vmem:[#allocation5 + $0x9c] sm:$0xff]
        %v245 = vld [vmem:[#allocation5 + $0xa4] sm:$0xf]
        %v246 = vld [vmem:[#allocation5 + $0xa8] sm:$0xff]
        %v247 = vld [vmem:[#allocation5 + $0xb0] sm:$0xf]
        %v248 = vld [vmem:[#allocation5 + $0xb4] sm:$0xff]
        %v249 = vld [vmem:[#allocation5 + $0xbc] sm:$0xf]
        %v282 = vunpack.c.l.b16 %v218
        %v283 = vunpack.c.h.b16 %v218
        %v284 = vunpack.c.l.b16 %v219
        %v285 = vunpack.c.l.b16 %v220
        %v286 = vunpack.c.h.b16 %v220
        %v287 = vunpack.c.l.b16 %v221
        %v288 = vunpack.c.l.b16 %v222
        %v289 = vunpack.c.h.b16 %v222
        %v290 = vunpack.c.l.b16 %v223
        %v291 = vunpack.c.l.b16 %v224
        %v292 = vunpack.c.h.b16 %v224
        %v293 = vunpack.c.l.b16 %v225
        %v294 = vunpack.c.l.b16 %v226
        %v295 = vunpack.c.h.b16 %v226
        %v296 = vunpack.c.l.b16 %v227
        %v297 = vunpack.c.l.b16 %v228
        %v298 = vunpack.c.h.b16 %v228
        %v299 = vunpack.c.l.b16 %v229
        %v300 = vunpack.c.l.b16 %v230
        %v301 = vunpack.c.h.b16 %v230
        %v302 = vunpack.c.l.b16 %v231
        %v303 = vunpack.c.l.b16 %v232
        %v304 = vunpack.c.h.b16 %v232
        %v305 = vunpack.c.l.b16 %v233
        %v306 = vunpack.c.l.b16 %v234
        %v307 = vunpack.c.h.b16 %v234
        %v308 = vunpack.c.l.b16 %v235
        %v309 = vunpack.c.l.b16 %v236
        %v310 = vunpack.c.h.b16 %v236
        %v311 = vunpack.c.l.b16 %v237
        %v312 = vunpack.c.l.b16 %v238
        %v313 = vunpack.c.h.b16 %v238
        %v314 = vunpack.c.l.b16 %v239
        %v315 = vunpack.c.l.b16 %v240
        %v316 = vunpack.c.h.b16 %v240
        %v317 = vunpack.c.l.b16 %v241
        %v318 = vunpack.c.l.b16 %v242
        %v319 = vunpack.c.h.b16 %v242
        %v320 = vunpack.c.l.b16 %v243
        %v321 = vunpack.c.l.b16 %v244
        %v322 = vunpack.c.h.b16 %v244
        %v323 = vunpack.c.l.b16 %v245
        %v324 = vunpack.c.l.b16 %v246
        %v325 = vunpack.c.h.b16 %v246
        %v326 = vunpack.c.l.b16 %v247
        %v327 = vunpack.c.l.b16 %v248
        %v328 = vunpack.c.h.b16 %v248
        %v329 = vunpack.c.l.b16 %v249
        %v330 = vpack.c.b16 %v285, %v282
        %v331 = vpack.c.b16 %v286, %v283
        %v332 = vpack.c.b16 %v287, %v284
        %v333 = vpack.c.b16 %v291, %v288
        %v334 = vpack.c.b16 %v292, %v289
        %v335 = vpack.c.b16 %v293, %v290
        %v336 = vpack.c.b16 %v297, %v294
        %v337 = vpack.c.b16 %v298, %v295
        %v338 = vpack.c.b16 %v299, %v296
        %v339 = vpack.c.b16 %v303, %v300
        %v340 = vpack.c.b16 %v304, %v301
        %v341 = vpack.c.b16 %v305, %v302
        %v342 = vpack.c.b16 %v309, %v306
        %v343 = vpack.c.b16 %v310, %v307
        %v344 = vpack.c.b16 %v311, %v308
        %v345 = vpack.c.b16 %v315, %v312
        %v346 = vpack.c.b16 %v316, %v313
        %v347 = vpack.c.b16 %v317, %v314
        %v348 = vpack.c.b16 %v321, %v318
        %v349 = vpack.c.b16 %v322, %v319
        %v350 = vpack.c.b16 %v323, %v320
        %v351 = vpack.c.b16 %v327, %v324
        %v352 = vpack.c.b16 %v328, %v325
        %v353 = vpack.c.b16 %v329, %v326
        %378 = vmatprep.subr.bf16.mxu0 %v331
        %379 = vmatpush1.bf16.msra.mxu0 %v330
        %380 = vmatprep.subr.bf16.mxu0 %v334
        %381 = vmatpush1.bf16.msra.mxu0 %v333
        %382 = vmatprep.subr.bf16.mxu0 %v337
        %383 = vmatpush1.bf16.msra.mxu0 %v336
        %384 = vmatprep.subr.bf16.mxu0 %v340
        %385 = vmatpush1.bf16.msra.mxu0 %v339
        %386 = vmatprep.subr.bf16.mxu0 %v343
        %387 = vmatpush1.bf16.msra.mxu0 %v342
        %388 = vmatprep.subr.bf16.mxu0 %v346
        %389 = vmatpush1.bf16.msra.mxu0 %v345
        %390 = vmatprep.subr.bf16.mxu0 %v349
        %391 = vmatpush1.bf16.msra.mxu0 %v348
        %392 = vmatprep.subr.bf16.mxu0 %v352
        %393 = vmatpush1.bf16.msra.mxu0 %v351
        %394 = vmatprep.subr.bf16.mxu0 0
        %395 = vmatpush1.bf16.msra.mxu0 0
        %396 = vmatprep.subr.bf16.mxu0 0
        %397 = vmatpush1.bf16.msra.mxu0 0
        %398 = vmatprep.subr.bf16.mxu0 0
        %399 = vmatpush1.bf16.msra.mxu0 0
        %400 = vmatprep.subr.bf16.mxu0 0
        %401 = vmatpush1.bf16.msra.mxu0 0
        %402 = vmatprep.subr.bf16.mxu0 0
        %403 = vmatpush1.bf16.msra.mxu0 0
        %404 = vmatprep.subr.bf16.mxu0 0
        %405 = vmatpush1.bf16.msra.mxu0 0
        %406 = vmatprep.subr.bf16.mxu0 0
        %407 = vmatpush1.bf16.msra.mxu0 0
        %408 = vmatprep.subr.bf16.mxu0 0
        %409 = vmatpush1.bf16.msra.mxu0 0
        %410 = vmatprep.mubr.bf16.mxu0 0
        %411 = vmatmul.mubr.bf16.gmra.mrb[0].mxu0 %v217
        %v412 = vpop.f32.mrb[0].mxu0
        %v413 = vadd.f32 0.0, %v412
        %v414 = vpop.f32.mrb[0].mxu0
        %v415 = vadd.f32 0.0, %v414
        %v416 = vpop.f32.mrb[0].mxu0
        %v417 = vpop.f32.mrb[0].mxu0
        %418 = vdwg.mxu0
        %419 = vmatprep.subr.bf16.mxu0 0
        %420 = vmatpush1.bf16.msra.mxu0 %v332
        %421 = vmatprep.subr.bf16.mxu0 0
        %422 = vmatpush1.bf16.msra.mxu0 %v335
        %423 = vmatprep.subr.bf16.mxu0 0
        %424 = vmatpush1.bf16.msra.mxu0 %v338
        %425 = vmatprep.subr.bf16.mxu0 0
        %426 = vmatpush1.bf16.msra.mxu0 %v341
        %427 = vmatprep.subr.bf16.mxu0 0
        %428 = vmatpush1.bf16.msra.mxu0 %v344
        %429 = vmatprep.subr.bf16.mxu0 0
        %430 = vmatpush1.bf16.msra.mxu0 %v347
        %431 = vmatprep.subr.bf16.mxu0 0
        %432 = vmatpush1.bf16.msra.mxu0 %v350
        %433 = vmatprep.subr.bf16.mxu0 0
        %434 = vmatpush1.bf16.msra.mxu0 %v353
        %435 = vmatprep.subr.bf16.mxu0 0
        %436 = vmatpush1.bf16.msra.mxu0 0
        %437 = vmatprep.subr.bf16.mxu0 0
        %438 = vmatpush1.bf16.msra.mxu0 0
        %439 = vmatprep.subr.bf16.mxu0 0
        %440 = vmatpush1.bf16.msra.mxu0 0
        %441 = vmatprep.subr.bf16.mxu0 0
        %442 = vmatpush1.bf16.msra.mxu0 0
        %443 = vmatprep.subr.bf16.mxu0 0
        %444 = vmatpush1.bf16.msra.mxu0 0
        %445 = vmatprep.subr.bf16.mxu0 0
        %446 = vmatpush1.bf16.msra.mxu0 0
        %447 = vmatprep.subr.bf16.mxu0 0
        %448 = vmatpush1.bf16.msra.mxu0 0
        %449 = vmatprep.subr.bf16.mxu0 0
        %450 = vmatpush1.bf16.msra.mxu0 0
        %451 = vmatprep.mubr.bf16.mxu0 0
        %452 = vmatmul.mubr.bf16.gmra.mrb[0].mxu0 %v217
        %v453 = vpop.f32.mrb[0].mxu0
        %v454 = vadd.f32 0.0, %v453
        %v455 = vpop.f32.mrb[0].mxu0
        %v456 = vpop.f32.mrb[0].mxu0
        %v457 = vpop.f32.mrb[0].mxu0
        %458 = vdwg.mxu0
        %v459 = vpack.c.bf16 %v413, %v413
        %v460 = vpack.c.bf16 %v415, %v415
        %v461 = vpack.c.bf16 %v454, %v454
        %462 = vmatprep.subr.bf16.mxu0 0
        %463 = vmatpush1.bf16.xpose.msra.mxu0 %v460
        %464 = vmatprep.subr.bf16.mxu0 0
        %465 = vmatpush1.bf16.xpose.msra.mxu0 0
        %466 = vmatprep.subr.bf16.mxu0 0
        %467 = vmatpush1.bf16.xpose.msra.mxu0 0
        %468 = vmatprep.subr.bf16.mxu0 0
        %469 = vmatpush1.bf16.xpose.msra.mxu0 0
        %470 = vmatprep.subr.bf16.mxu0 0
        %471 = vmatpush1.bf16.xpose.msra.mxu0 0
        %472 = vmatprep.subr.bf16.mxu0 0
        %473 = vmatpush1.bf16.xpose.msra.mxu0 0
        %474 = vmatprep.subr.bf16.mxu0 0
        %475 = vmatpush1.bf16.xpose.msra.mxu0 0
        %476 = vmatprep.subr.bf16.mxu0 0
        %477 = vmatpush1.bf16.xpose.msra.mxu0 0
        %478 = vmatprep.subr.bf16.mxu0 0
        %479 = vmatpush1.bf16.xpose.msra.mxu0 0
        %480 = vmatprep.subr.bf16.mxu0 0
        %481 = vmatpush1.bf16.xpose.msra.mxu0 0
        %482 = vmatprep.subr.bf16.mxu0 0
        %483 = vmatpush1.bf16.xpose.msra.mxu0 0
        %484 = vmatprep.subr.bf16.mxu0 0
        %485 = vmatpush1.bf16.xpose.msra.mxu0 0
        %486 = vmatprep.subr.bf16.mxu0 0
        %487 = vmatpush1.bf16.xpose.msra.mxu0 0
        %488 = vmatprep.subr.bf16.mxu0 0
        %489 = vmatpush1.bf16.xpose.msra.mxu0 0
        %490 = vmatprep.subr.bf16.mxu0 0
        %491 = vmatpush1.bf16.xpose.msra.mxu0 0
        %492 = vmatprep.subr.bf16.mxu0 0
        %493 = vmatpush1.bf16.xpose.msra.mxu0 0
        %494 = vmatprep.mubr.bf16.mxu0 0
        %495 = vmatmul.mubr.bf16.gmra.mrb[0].mxu0 %v459
        %v496 = vpop.f32.mrb[0].mxu0
        %v497 = vadd.f32 0.0, %v496
        %v498 = vpop.f32.mrb[0].mxu0
        %v499 = vpop.f32.mrb[0].mxu0
        %v500 = vpop.f32.mrb[0].mxu0
        %501 = vdwg.mxu0
        %vm502 = vcmask 64512
        %v503 = vsel %vm502, %v497, -inf
        %504 = vmax.xlane.f32.xlu0 %v503
        %v505 = vpop.xlane.xlu0 %504
        %v506 = vsub.f32 %v497, %v505
        %v507 = vmul.f32 %v506, 1.442695
        %v508 = vpow.pop %v507
        %v509 = vsel %vm502, %v508, 0.0
        %510 = vadd.xlane.f32.xlu0 %v509
        %v511 = vpop.xlane.xlu0 %510
        %v512 = vrcp.pop %v511
        %v513 = vmul.f32 %v508, %v512
        %v514 = vpack.c.bf16 %v513, %v513
        %v516 = vsel %vm502, %v514, 0
        %vm518 = vcmask 1043456
        %v520 = vsel %vm518, %v461, 0
        %522 = vmatprep.subr.bf16.mxu0 0
        %523 = vmatpush1.bf16.msra.mxu0 %v520
        %524 = vmatprep.subr.bf16.mxu0 0
        %525 = vmatpush1.bf16.msra.mxu0 0
        %526 = vmatprep.subr.bf16.mxu0 0
        %527 = vmatpush1.bf16.msra.mxu0 0
        %528 = vmatprep.subr.bf16.mxu0 0
        %529 = vmatpush1.bf16.msra.mxu0 0
        %530 = vmatprep.subr.bf16.mxu0 0
        %531 = vmatpush1.bf16.msra.mxu0 0
        %532 = vmatprep.subr.bf16.mxu0 0
        %533 = vmatpush1.bf16.msra.mxu0 0
        %534 = vmatprep.subr.bf16.mxu0 0
        %535 = vmatpush1.bf16.msra.mxu0 0
        %536 = vmatprep.subr.bf16.mxu0 0
        %537 = vmatpush1.bf16.msra.mxu0 0
        %538 = vmatprep.subr.bf16.mxu0 0
        %539 = vmatpush1.bf16.msra.mxu0 0
        %540 = vmatprep.subr.bf16.mxu0 0
        %541 = vmatpush1.bf16.msra.mxu0 0
        %542 = vmatprep.subr.bf16.mxu0 0
        %543 = vmatpush1.bf16.msra.mxu0 0
        %544 = vmatprep.subr.bf16.mxu0 0
        %545 = vmatpush1.bf16.msra.mxu0 0
        %546 = vmatprep.subr.bf16.mxu0 0
        %547 = vmatpush1.bf16.msra.mxu0 0
        %548 = vmatprep.subr.bf16.mxu0 0
        %549 = vmatpush1.bf16.msra.mxu0 0
        %550 = vmatprep.subr.bf16.mxu0 0
        %551 = vmatpush1.bf16.msra.mxu0 0
        %552 = vmatprep.subr.bf16.mxu0 0
        %553 = vmatpush1.bf16.msra.mxu0 0
        %554 = vmatprep.mubr.bf16.mxu0 0
        %555 = vmatmul.mubr.bf16.gmra.mrb[0].mxu0 %v516
        %v556 = vpop.f32.mrb[0].mxu0
        %v557 = vadd.f32 0.0, %v556
        %v558 = vpop.f32.mrb[0].mxu0
        %v559 = vpop.f32.mrb[0].mxu0
        %v560 = vpop.f32.mrb[0].mxu0
        %561 = vdwg.mxu0
        %v562 = vpack.c.bf16 %v557, %v557
        %v563 = vld [vmem:[#allocation7] sm:$0xf]
        %v564 = vld [vmem:[#allocation7 + $0x4] sm:$0xf]
        %v565 = vld [vmem:[#allocation7 + $0x8] sm:$0xf]
        %v566 = vld [vmem:[#allocation7 + $0xc] sm:$0xf]
        %v567 = vld [vmem:[#allocation7 + $0x10] sm:$0xf]
        %v568 = vld [vmem:[#allocation7 + $0x14] sm:$0xf]
        %v569 = vld [vmem:[#allocation7 + $0x18] sm:$0xf]
        %v570 = vld [vmem:[#allocation7 + $0x1c] sm:$0xf]
        %v571 = vld [vmem:[#allocation7 + $0x20] sm:$0xf]
        %v572 = vld [vmem:[#allocation7 + $0x24] sm:$0xf]
        %v573 = vld [vmem:[#allocation7 + $0x28] sm:$0xf]
        %v574 = vld [vmem:[#allocation7 + $0x2c] sm:$0xf]
        %v575 = vld [vmem:[#allocation7 + $0x30] sm:$0xf]
        %v576 = vld [vmem:[#allocation7 + $0x34] sm:$0xf]
        %v577 = vld [vmem:[#allocation7 + $0x38] sm:$0xf]
        %v578 = vld [vmem:[#allocation7 + $0x3c] sm:$0xf]
        %v595 = vunpack.c.l.b16 %v563
        %v596 = vunpack.c.l.b16 %v564
        %v597 = vunpack.c.l.b16 %v565
        %v598 = vunpack.c.l.b16 %v566
        %v599 = vunpack.c.l.b16 %v567
        %v600 = vunpack.c.l.b16 %v568
        %v601 = vunpack.c.l.b16 %v569
        %v602 = vunpack.c.l.b16 %v570
        %v603 = vunpack.c.l.b16 %v571
        %v604 = vunpack.c.l.b16 %v572
        %v605 = vunpack.c.l.b16 %v573
        %v606 = vunpack.c.l.b16 %v574
        %v607 = vunpack.c.l.b16 %v575
        %v608 = vunpack.c.l.b16 %v576
        %v609 = vunpack.c.l.b16 %v577
        %v610 = vunpack.c.l.b16 %v578
        %v611 = vpack.c.b16 %v596, %v595
        %v612 = vpack.c.b16 %v598, %v597
        %v613 = vpack.c.b16 %v600, %v599
        %v614 = vpack.c.b16 %v602, %v601
        %v615 = vpack.c.b16 %v604, %v603
        %v616 = vpack.c.b16 %v606, %v605
        %v617 = vpack.c.b16 %v608, %v607
        %v618 = vpack.c.b16 %v610, %v609
        %627 = vmatprep.subr.bf16.mxu0 0
        %628 = vmatpush1.bf16.msra.mxu0 %v611
        %629 = vmatprep.subr.bf16.mxu0 0
        %630 = vmatpush1.bf16.msra.mxu0 %v612
        %631 = vmatprep.subr.bf16.mxu0 0
        %632 = vmatpush1.bf16.msra.mxu0 %v613
        %633 = vmatprep.subr.bf16.mxu0 0
        %634 = vmatpush1.bf16.msra.mxu0 %v614
        %635 = vmatprep.subr.bf16.mxu0 0
        %636 = vmatpush1.bf16.msra.mxu0 %v615
        %637 = vmatprep.subr.bf16.mxu0 0
        %638 = vmatpush1.bf16.msra.mxu0 %v616
        %639 = vmatprep.subr.bf16.mxu0 0
        %640 = vmatpush1.bf16.msra.mxu0 %v617
        %641 = vmatprep.subr.bf16.mxu0 0
        %642 = vmatpush1.bf16.msra.mxu0 %v618
        %643 = vmatprep.subr.bf16.mxu0 0
        %644 = vmatpush1.bf16.msra.mxu0 0
        %645 = vmatprep.subr.bf16.mxu0 0
        %646 = vmatpush1.bf16.msra.mxu0 0
        %647 = vmatprep.subr.bf16.mxu0 0
        %648 = vmatpush1.bf16.msra.mxu0 0
        %649 = vmatprep.subr.bf16.mxu0 0
        %650 = vmatpush1.bf16.msra.mxu0 0
        %651 = vmatprep.subr.bf16.mxu0 0
        %652 = vmatpush1.bf16.msra.mxu0 0
        %653 = vmatprep.subr.bf16.mxu0 0
        %654 = vmatpush1.bf16.msra.mxu0 0
        %655 = vmatprep.subr.bf16.mxu0 0
        %656 = vmatpush1.bf16.msra.mxu0 0
        %657 = vmatprep.subr.bf16.mxu0 0
        %658 = vmatpush1.bf16.msra.mxu0 0
        %659 = vmatprep.mubr.bf16.mxu0 0
        %660 = vmatmul.mubr.bf16.gmra.mrb[0].mxu0 %v562
        %v661 = vpop.f32.mrb[0].mxu0
        %v662 = vadd.f32 0.0, %v661
        %v663 = vpop.f32.mrb[0].mxu0
        %v664 = vpop.f32.mrb[0].mxu0
        %v665 = vpop.f32.mrb[0].mxu0
        %666 = vdwg.mxu0
        %667 = vst [vmem:[%s214] sm:$0xff] %v662
        %s668 = sand.u32 %s97, 1
        %s669 = scalar_lea.sflag [#allocation4], %s668
        %s670 = sand.u32 %s97, 1
        %s671 = smul.addr %s670, 8
        %s672 = scalar_lea.vmem [#allocation8], %s671
        // Predicated region
        $region45: #{tpu_custom_call.1} parent=31 // pred_check
          %p673 = pneg %p107
        $region46: #{tpu_custom_call.1} parent=31 // pred_check_branch
          %675 = sbr.rel (%p673) target = $region48
        $region47: #{tpu_custom_call.1} parent=31 // pred_region
          %s677 = ssub.s32 128, 128
          %678 = vsyncadd %s669, %s677
          %s679 = smul.addr %s21, 128
          %s680 = scalar_lea.hbm %s3, %s679
          %s682 = sshll.u32 %s672, 4
          %s683 = int_to_ptr.vmem [resolvable:$true] %s682
          %685 = dma.vmem_to_hbm [thread:$0]  %s683, 128, %s680, %s669
        $region48: #{tpu_custom_call.1} parent=31 // pred_fallthru
          _
      $region32: #{tpu_custom_call.1} parent=5 // pred_fallthru
        _
      %p686 = scmp.le.s32.totalorder 2, %s16
      // Predicated region
      $region49: #{tpu_custom_call.1} parent=5 // pred_check
        %p687 = pneg %p686
      $region50: #{tpu_custom_call.1} parent=5 // pred_check_branch
        %689 = sbr.rel (%p687) target = $region52
      $region51: #{tpu_custom_call.1} parent=5 // pred_region
        %s690 = ssub.s32 %s16, 2
        // Predicated region
        $region53: #{tpu_custom_call.1} parent=51 // pred_check
          %p691 = pneg %p113
        $region54: #{tpu_custom_call.1} parent=51 // pred_check_branch
          %693 = sbr.rel (%p691) target = $region56
        $region55: #{tpu_custom_call.1} parent=51 // pred_region
          %s694 = sand.u32 %s98, 1
          %s695 = scalar_lea.sflag [#allocation4], %s694
          %s696 = sand.u32 %s98, 1
          %s697 = smul.addr %s696, 8
          %s698 = scalar_lea.vmem [#allocation8], %s697
          %699 = dma.done %s695, 128
        $region56: #{tpu_custom_call.1} parent=51 // pred_fallthru
          _
      $region52: #{tpu_custom_call.1} parent=5 // pred_fallthru
        _
    $region6: #{tpu_custom_call.1} parent=1 // loop_footer
      %s20 = sadd.s32 1, %s16
    $region7: #{tpu_custom_call.1} parent=1 // loop_footer_branch
      %15 = sbr.rel target = $region3
    $region8: #{tpu_custom_call.1} parent=1 // loop_exit
      _
    %700 = vsyncpa [#allocation3], 1
    %s701 = scalar_lea.sflag [#allocation3], 1
    %702 = vsyncpa %s701, 1
    %703 = vsyncpa [#allocation6], 1
    %704 = vsyncpa [#allocation4], 1
    %s705 = scalar_lea.sflag [#allocation4], 1
    %706 = vsyncpa %s705, 1

</llo_original>
